<compile_context>
chip_gen: v5e
topology: v5e:2x2
jax: 0.10.0
libtpu: 0.0.40
codegen_flags: <defaults>
</compile_context>

<pallas_src>
import functools

import jax
import jax.numpy as jnp
from jax.experimental import pallas as pl
from jax.experimental.pallas import tpu as pltpu

INPUT_DIM = 64
HIDDEN_DIMS = [256, 512, 256, 128]
OUTPUT_DIM = 28
OUT_PAD = 128          # lane-dense padded output width
LN_EPS = 1e-5
LEAKY_SLOPE = 0.2
TEMPERATURE = 0.5
NEG_BIG = -1e30        # bias for padded logit lanes -> exp() == 0


def _round_up(n, m):
    return ((n + m - 1) // m) * m


def mlp_kernel(x_ref,
               w1, p1, w2, p2, w3, p3, w4, p4,
               w5, b5,
               out_ref):
    # Input LayerNorm (affine already folded into w1/b1): single-pass mean /
    # variance in f32, normalized activations emitted straight in bf16 for
    # the MXU.
    x = x_ref[...].astype(jnp.float32)
    mu = jnp.mean(x, axis=-1, keepdims=True)
    var = jnp.maximum(jnp.mean(x * x, axis=-1, keepdims=True) - mu * mu, 0.0)
    h = ((x - mu) * jax.lax.rsqrt(var + LN_EPS)).astype(jnp.bfloat16)

    # Hidden blocks: Linear (bf16 MXU operands, f32 accumulation) -> LayerNorm
    # -> LeakyReLU(0.2) -> Dropout (eval-mode identity).  p holds (bias,
    # gamma, beta) packed as a (3, d) slab.
    for w, p in ((w1, p1), (w2, p2), (w3, p3), (w4, p4)):
        b, g, be = p[0:1, :], p[1:2, :], p[2:3, :]
        z = jnp.dot(h, w[...], preferred_element_type=jnp.float32) + b
        mu = jnp.mean(z, axis=-1, keepdims=True)
        var = jnp.maximum(
            jnp.mean(z * z, axis=-1, keepdims=True) - mu * mu, 0.0)
        y = (z - mu) * jax.lax.rsqrt(var + LN_EPS) * g + be
        h = jnp.maximum(y, LEAKY_SLOPE * y).astype(jnp.bfloat16)

    # Output Linear.  1/temperature is already folded into w5/b5; lanes
    # [OUTPUT_DIM:OUT_PAD) carry a -1e30 bias so they contribute 0 after exp.
    logits = jnp.dot(h, w5[...], preferred_element_type=jnp.float32) + b5[...]

    # Numerically stable softmax over the full 128-lane vreg; exact divide so
    # rows sum to 1 within f32 precision.
    s = logits - jnp.max(logits, axis=-1, keepdims=True)
    e = jnp.exp(s)
    out_ref[...] = (e / jnp.sum(e, axis=-1, keepdims=True)).astype(out_ref.dtype)


def init_params(key, input_dim=INPUT_DIM, hidden_dims=HIDDEN_DIMS,
                output_dim=OUTPUT_DIM):
    """Parameter init matching the module's _init_weights:
       Linear: xavier_normal_ (std = sqrt(2/(fan_in+fan_out))), bias = 0.
       LayerNorm: gamma = 1, beta = 0."""
    params = []
    params.append(jnp.ones((1, input_dim), jnp.float32))    # input LN gamma
    params.append(jnp.zeros((1, input_dim), jnp.float32))   # input LN beta

    dims = [input_dim] + hidden_dims
    keys = jax.random.split(key, len(hidden_dims) + 1)
    for i, (d_in, d_out) in enumerate(zip(dims[:-1], dims[1:])):
        std = (2.0 / (d_in + d_out)) ** 0.5
        w = jax.random.normal(keys[i], (d_in, d_out), jnp.float32) * std
        params.append(w)                                     # weight (in, out)
        params.append(jnp.zeros((1, d_out), jnp.float32))    # bias
        params.append(jnp.ones((1, d_out), jnp.float32))     # LN gamma
        params.append(jnp.zeros((1, d_out), jnp.float32))    # LN beta

    d_in, d_out = hidden_dims[-1], output_dim
    std = (2.0 / (d_in + d_out)) ** 0.5
    w_out = jax.random.normal(keys[-1], (d_in, d_out), jnp.float32) * std
    params.append(w_out)                                     # output weight
    params.append(jnp.zeros((1, d_out), jnp.float32))        # output bias
    return params


def _prepare_params(params):
    """Fold the input LayerNorm affine into the first Linear, fold
    1/temperature into the output layer, pad the output layer to a lane-dense
    128-wide logit slab, pack per-layer (bias, gamma, beta) into (3, d) slabs,
    and cast matmul weights to bf16."""
    (ln0_g, ln0_b,
     w1, b1, g1, be1,
     w2, b2, g2, be2,
     w3, b3, g3, be3,
     w4, b4, g4, be4,
     w5, b5) = params

    # Exact algebraic fold of the input LN affine (done once, in f32):
    #   (x_norm * g + be) @ W + b == x_norm @ (g^T * W) + (be @ W + b)
    b1 = b1 + ln0_b @ w1
    w1 = ln0_g.reshape(-1, 1) * w1

    # Fold 1/temperature (2.0, exact power of two) and pad output to 128 lanes.
    inv_t = 1.0 / TEMPERATURE
    w5 = w5 * inv_t
    b5 = b5 * inv_t
    pad = OUT_PAD - OUTPUT_DIM
    w5 = jnp.pad(w5, ((0, 0), (0, pad)))
    b5 = jnp.concatenate(
        [b5, jnp.full((1, pad), NEG_BIG, jnp.float32)], axis=-1)

    def pack(b, g, be):
        return jnp.concatenate([b, g, be], axis=0)           # (3, d) f32

    bf16 = lambda w: w.astype(jnp.bfloat16)
    return [bf16(w1), pack(b1, g1, be1),
            bf16(w2), pack(b2, g2, be2),
            bf16(w3), pack(b3, g3, be3),
            bf16(w4), pack(b4, g4, be4),
            bf16(w5), b5]


@functools.partial(jax.jit, static_argnames=("tile_b",))
def refined_ann_forward(x, params, tile_b=1024):
    B, D = x.shape
    assert D == INPUT_DIM

    # Batch tile: multiple of 8 sublanes, large to amortize the ~0.35 us
    # per-grid-step overhead, clamped for small batches, and split so the
    # grid has >= 2 steps whenever possible (v7x megacore utilization).
    b8 = _round_up(max(B, 1), 8)
    tb = min(max(8, _round_up(tile_b, 8)), b8)
    if b8 > 8:
        tb = min(tb, _round_up(pl.cdiv(b8, 2), 8))
    grid = (pl.cdiv(B, tb),)       # partial last block: OOB writes dropped,
                                   # garbage rows are independent & discarded

    prepared = _prepare_params(params)

    x_spec = pl.BlockSpec((tb, D), lambda i: (i, 0))
    # Parameters are block-invariant: keep them single-buffered / resident.
    param_specs = [
        pl.BlockSpec(p.shape, lambda i: (0, 0),
                     pipeline_mode=pl.Buffered(buffer_count=1))
        for p in prepared
    ]
    out_spec = pl.BlockSpec((tb, OUT_PAD), lambda i: (i, 0))

    out_padded = pl.pallas_call(
        mlp_kernel,
        out_shape=jax.ShapeDtypeStruct((B, OUT_PAD), jnp.float32),
        grid_spec=pltpu.PrefetchScalarGridSpec(
            num_scalar_prefetch=0,
            grid=grid,
            in_specs=[x_spec] + param_specs,
            out_specs=out_spec,
        ),
        compiler_params=pltpu.CompilerParams(
            dimension_semantics=("parallel",),
            # Explicit limit: v5e's scoped-VMEM default is 16 MiB and the f32
            # intermediates at tb=1024 plus double-buffered x/out approach it.
            vmem_limit_bytes=32 * 1024 * 1024,
        ),
    )(x, *prepared)

    # TODO(synk): returning the lane-dense (B, 128) slab (or fusing this slice
    # into the consumer) would save one small HBM pass; sliced here to match
    # the module's (B, 28) output contract.
    return out_padded[:, :OUTPUT_DIM]


def reference_forward(x, params, matmul_dtype=jnp.float32):
    """Pure-JAX reference mirroring the PyTorch module. matmul_dtype=bf16
    mirrors the kernel's MXU input precision for tight comparison."""
    (ln0_g, ln0_b,
     w1, b1, g1, be1,
     w2, b2, g2, be2,
     w3, b3, g3, be3,
     w4, b4, g4, be4,
     w5, b5) = params

    def ln(h, gamma, beta):
        mu = jnp.mean(h, axis=-1, keepdims=True)
        var = jnp.mean((h - mu) * (h - mu), axis=-1, keepdims=True)
        return (h - mu) * jax.lax.rsqrt(var + LN_EPS) * gamma + beta

    def mm(a, w):
        return jnp.dot(a.astype(matmul_dtype), w.astype(matmul_dtype),
                       preferred_element_type=jnp.float32)

    h = ln(x.astype(jnp.float32), ln0_g, ln0_b)
    for w, b, g, be in ((w1, b1, g1, be1), (w2, b2, g2, be2),
                        (w3, b3, g3, be3), (w4, b4, g4, be4)):
        z = ln(mm(h, w) + b, g, be)
        h = jnp.where(z > 0, z, LEAKY_SLOPE * z)
    logits = mm(h, w5) + b5
    return jax.nn.softmax(logits / TEMPERATURE, axis=-1)


if __name__ == "__main__":
    key = jax.random.PRNGKey(0)
    key_x, key_p = jax.random.split(key)

    params = init_params(key_p)

    # Small batch: single grid step.
    B = 8
    x = jax.random.normal(key_x, (B, INPUT_DIM), jnp.float32)
    out = jax.block_until_ready(refined_ann_forward(x, params))
    assert out.shape == (B, OUTPUT_DIM)
    assert jnp.allclose(jnp.sum(out, axis=-1), 1.0, atol=1e-3)
    ref_bf16 = reference_forward(x, params, matmul_dtype=jnp.bfloat16)
    ref_f32 = reference_forward(x, params, matmul_dtype=jnp.float32)
    assert jnp.allclose(out, ref_bf16, atol=5e-3), \
        float(jnp.max(jnp.abs(out - ref_bf16)))
    assert jnp.allclose(out, ref_f32, atol=1e-1), \
        float(jnp.max(jnp.abs(out - ref_f32)))

    # Ragged batch: exercises the partial last block + a multi-step grid.
    B2 = 200
    x2 = jax.random.normal(key_x, (B2, INPUT_DIM), jnp.float32)
    out2 = jax.block_until_ready(refined_ann_forward(x2, params))
    assert out2.shape == (B2, OUTPUT_DIM)
    assert jnp.allclose(jnp.sum(out2, axis=-1), 1.0, atol=1e-3)
    ref2 = reference_forward(x2, params, matmul_dtype=jnp.bfloat16)
    assert jnp.allclose(out2, ref2, atol=5e-3), \
        float(jnp.max(jnp.abs(out2 - ref2)))

    # Small explicit tile -> 4 grid steps, still ragged.
    out3 = jax.block_until_ready(refined_ann_forward(x2, params, tile_b=64))
    assert out3.shape == (B2, OUTPUT_DIM)
    assert jnp.allclose(out3, ref2, atol=5e-3)

    print("KERNEL_OK")
</pallas_src>

<mosaic_0001>
module attributes {stable_mosaic.version = 11 : i64} {
  func.func @mlp_kernel(%arg0: i32, %arg1: memref<8x64xf32, #tpu.memory_space<vmem>>, %arg2: memref<64x256xbf16, #tpu.memory_space<vmem>>, %arg3: memref<3x256xf32, #tpu.memory_space<vmem>>, %arg4: memref<256x512xbf16, #tpu.memory_space<vmem>>, %arg5: memref<3x512xf32, #tpu.memory_space<vmem>>, %arg6: memref<512x256xbf16, #tpu.memory_space<vmem>>, %arg7: memref<3x256xf32, #tpu.memory_space<vmem>>, %arg8: memref<256x128xbf16, #tpu.memory_space<vmem>>, %arg9: memref<3x128xf32, #tpu.memory_space<vmem>>, %arg10: memref<128x128xbf16, #tpu.memory_space<vmem>>, %arg11: memref<1x128xf32, #tpu.memory_space<vmem>>, %arg12: memref<8x128xf32, #tpu.memory_space<vmem>>) attributes {dimension_semantics = [#tpu.dimension_semantics<parallel>], iteration_bounds = array<i64: 1>, scalar_prefetch = 0 : i64, scratch_operands = 0 : i64, tpu.core_type = #tpu.core_type<tc>, window_params = [{transform_indices = @transform_0, window_bounds = array<i64: 8, 64>}, {pipeline_mode = #tpu.pipeline_mode<synchronous>, transform_indices = @transform_1, window_bounds = array<i64: 64, 256>}, {pipeline_mode = #tpu.pipeline_mode<synchronous>, transform_indices = @transform_2, window_bounds = array<i64: 3, 256>}, {pipeline_mode = #tpu.pipeline_mode<synchronous>, transform_indices = @transform_3, window_bounds = array<i64: 256, 512>}, {pipeline_mode = #tpu.pipeline_mode<synchronous>, transform_indices = @transform_4, window_bounds = array<i64: 3, 512>}, {pipeline_mode = #tpu.pipeline_mode<synchronous>, transform_indices = @transform_5, window_bounds = array<i64: 512, 256>}, {pipeline_mode = #tpu.pipeline_mode<synchronous>, transform_indices = @transform_6, window_bounds = array<i64: 3, 256>}, {pipeline_mode = #tpu.pipeline_mode<synchronous>, transform_indices = @transform_7, window_bounds = array<i64: 256, 128>}, {pipeline_mode = #tpu.pipeline_mode<synchronous>, transform_indices = @transform_8, window_bounds = array<i64: 3, 128>}, {pipeline_mode = #tpu.pipeline_mode<synchronous>, transform_indices = @transform_9, window_bounds = array<i64: 128, 128>}, {pipeline_mode = #tpu.pipeline_mode<synchronous>, transform_indices = @transform_10, window_bounds = array<i64: 1, 128>}, {transform_indices = @transform_11, window_bounds = array<i64: 8, 128>}]} {
    %c0 = arith.constant 0 : index
    %c0_0 = arith.constant 0 : index
    %0 = vector.load %arg1[%c0, %c0_0] : memref<8x64xf32, #tpu.memory_space<vmem>>, vector<8x64xf32>
    %cst = arith.constant dense<0.000000e+00> : vector<8xf32>
    %1 = vector.multi_reduction <add>, %0, %cst [1] : vector<8x64xf32> to vector<8xf32>
    %2 = vector.shape_cast %1 : vector<8xf32> to vector<8x1xf32>
    %cst_1 = arith.constant 6.400000e+01 : f32
    %3 = vector.broadcast %cst_1 : f32 to vector<8x1xf32>
    %4 = arith.divf %2, %3 : vector<8x1xf32>
    %5 = arith.mulf %0, %0 : vector<8x64xf32>
    %cst_2 = arith.constant dense<0.000000e+00> : vector<8xf32>
    %6 = vector.multi_reduction <add>, %5, %cst_2 [1] : vector<8x64xf32> to vector<8xf32>
    %7 = vector.shape_cast %6 : vector<8xf32> to vector<8x1xf32>
    %cst_3 = arith.constant 6.400000e+01 : f32
    %8 = vector.broadcast %cst_3 : f32 to vector<8x1xf32>
    %9 = arith.divf %7, %8 : vector<8x1xf32>
    %10 = arith.mulf %4, %4 : vector<8x1xf32>
    %11 = arith.subf %9, %10 : vector<8x1xf32>
    %cst_4 = arith.constant 0.000000e+00 : f32
    %12 = vector.broadcast %cst_4 : f32 to vector<8x1xf32>
    %13 = arith.maximumf %11, %12 : vector<8x1xf32>
    %14 = vector.broadcast %4 : vector<8x1xf32> to vector<8x64xf32>
    %15 = arith.subf %0, %14 : vector<8x64xf32>
    %cst_5 = arith.constant 9.99999974E-6 : f32
    %16 = vector.broadcast %cst_5 : f32 to vector<8x1xf32>
    %17 = arith.addf %13, %16 : vector<8x1xf32>
    %18 = math.rsqrt %17 : vector<8x1xf32>
    %19 = vector.broadcast %18 : vector<8x1xf32> to vector<8x64xf32>
    %20 = arith.mulf %15, %19 : vector<8x64xf32>
    %21 = arith.truncf %20 : vector<8x64xf32> to vector<8x64xbf16>
    %c0_6 = arith.constant 0 : index
    %c0_7 = arith.constant 0 : index
    %22 = vector.load %arg3[%c0_6, %c0_7] : memref<3x256xf32, #tpu.memory_space<vmem>>, vector<1x256xf32>
    %c1 = arith.constant 1 : index
    %c0_8 = arith.constant 0 : index
    %23 = vector.load %arg3[%c1, %c0_8] : memref<3x256xf32, #tpu.memory_space<vmem>>, vector<1x256xf32>
    %c2 = arith.constant 2 : index
    %c0_9 = arith.constant 0 : index
    %24 = vector.load %arg3[%c2, %c0_9] : memref<3x256xf32, #tpu.memory_space<vmem>>, vector<1x256xf32>
    %c0_10 = arith.constant 0 : index
    %c0_11 = arith.constant 0 : index
    %25 = vector.load %arg2[%c0_10, %c0_11] : memref<64x256xbf16, #tpu.memory_space<vmem>>, vector<64x256xbf16>
    %cst_12 = arith.constant dense<0.000000e+00> : vector<8x256xf32>
    %26 = tpu.matmul %21, %25, %cst_12 {dimension_numbers = #tpu.dot_dimension_numbers<[1], [0], [0], [1], [0, 0, 1, 1], [], []>} : vector<8x64xbf16>, vector<64x256xbf16>, vector<8x256xf32> -> vector<8x256xf32>
    %27 = vector.broadcast %22 : vector<1x256xf32> to vector<8x256xf32>
    %28 = arith.addf %26, %27 : vector<8x256xf32>
    %cst_13 = arith.constant dense<0.000000e+00> : vector<8xf32>
    %29 = vector.multi_reduction <add>, %28, %cst_13 [1] : vector<8x256xf32> to vector<8xf32>
    %30 = vector.shape_cast %29 : vector<8xf32> to vector<8x1xf32>
    %cst_14 = arith.constant 2.560000e+02 : f32
    %31 = vector.broadcast %cst_14 : f32 to vector<8x1xf32>
    %32 = arith.divf %30, %31 : vector<8x1xf32>
    %33 = arith.mulf %28, %28 : vector<8x256xf32>
    %cst_15 = arith.constant dense<0.000000e+00> : vector<8xf32>
    %34 = vector.multi_reduction <add>, %33, %cst_15 [1] : vector<8x256xf32> to vector<8xf32>
    %35 = vector.shape_cast %34 : vector<8xf32> to vector<8x1xf32>
    %cst_16 = arith.constant 2.560000e+02 : f32
    %36 = vector.broadcast %cst_16 : f32 to vector<8x1xf32>
    %37 = arith.divf %35, %36 : vector<8x1xf32>
    %38 = arith.mulf %32, %32 : vector<8x1xf32>
    %39 = arith.subf %37, %38 : vector<8x1xf32>
    %cst_17 = arith.constant 0.000000e+00 : f32
    %40 = vector.broadcast %cst_17 : f32 to vector<8x1xf32>
    %41 = arith.maximumf %39, %40 : vector<8x1xf32>
    %42 = vector.broadcast %32 : vector<8x1xf32> to vector<8x256xf32>
    %43 = arith.subf %28, %42 : vector<8x256xf32>
    %cst_18 = arith.constant 9.99999974E-6 : f32
    %44 = vector.broadcast %cst_18 : f32 to vector<8x1xf32>
    %45 = arith.addf %41, %44 : vector<8x1xf32>
    %46 = math.rsqrt %45 : vector<8x1xf32>
    %47 = vector.broadcast %46 : vector<8x1xf32> to vector<8x256xf32>
    %48 = arith.mulf %43, %47 : vector<8x256xf32>
    %49 = vector.broadcast %23 : vector<1x256xf32> to vector<8x256xf32>
    %50 = arith.mulf %48, %49 : vector<8x256xf32>
    %51 = vector.broadcast %24 : vector<1x256xf32> to vector<8x256xf32>
    %52 = arith.addf %50, %51 : vector<8x256xf32>
    %cst_19 = arith.constant 2.000000e-01 : f32
    %53 = vector.broadcast %cst_19 : f32 to vector<8x256xf32>
    %54 = arith.mulf %53, %52 : vector<8x256xf32>
    %55 = arith.maximumf %52, %54 : vector<8x256xf32>
    %56 = arith.truncf %55 : vector<8x256xf32> to vector<8x256xbf16>
    %c0_20 = arith.constant 0 : index
    %c0_21 = arith.constant 0 : index
    %57 = vector.load %arg5[%c0_20, %c0_21] : memref<3x512xf32, #tpu.memory_space<vmem>>, vector<1x512xf32>
    %c1_22 = arith.constant 1 : index
    %c0_23 = arith.constant 0 : index
    %58 = vector.load %arg5[%c1_22, %c0_23] : memref<3x512xf32, #tpu.memory_space<vmem>>, vector<1x512xf32>
    %c2_24 = arith.constant 2 : index
    %c0_25 = arith.constant 0 : index
    %59 = vector.load %arg5[%c2_24, %c0_25] : memref<3x512xf32, #tpu.memory_space<vmem>>, vector<1x512xf32>
    %c0_26 = arith.constant 0 : index
    %c0_27 = arith.constant 0 : index
    %60 = vector.load %arg4[%c0_26, %c0_27] : memref<256x512xbf16, #tpu.memory_space<vmem>>, vector<256x512xbf16>
    %cst_28 = arith.constant dense<0.000000e+00> : vector<8x512xf32>
    %61 = tpu.matmul %56, %60, %cst_28 {dimension_numbers = #tpu.dot_dimension_numbers<[1], [0], [0], [1], [0, 0, 1, 1], [], []>} : vector<8x256xbf16>, vector<256x512xbf16>, vector<8x512xf32> -> vector<8x512xf32>
    %62 = vector.broadcast %57 : vector<1x512xf32> to vector<8x512xf32>
    %63 = arith.addf %61, %62 : vector<8x512xf32>
    %cst_29 = arith.constant dense<0.000000e+00> : vector<8xf32>
    %64 = vector.multi_reduction <add>, %63, %cst_29 [1] : vector<8x512xf32> to vector<8xf32>
    %65 = vector.shape_cast %64 : vector<8xf32> to vector<8x1xf32>
    %cst_30 = arith.constant 5.120000e+02 : f32
    %66 = vector.broadcast %cst_30 : f32 to vector<8x1xf32>
    %67 = arith.divf %65, %66 : vector<8x1xf32>
    %68 = arith.mulf %63, %63 : vector<8x512xf32>
    %cst_31 = arith.constant dense<0.000000e+00> : vector<8xf32>
    %69 = vector.multi_reduction <add>, %68, %cst_31 [1] : vector<8x512xf32> to vector<8xf32>
    %70 = vector.shape_cast %69 : vector<8xf32> to vector<8x1xf32>
    %cst_32 = arith.constant 5.120000e+02 : f32
    %71 = vector.broadcast %cst_32 : f32 to vector<8x1xf32>
    %72 = arith.divf %70, %71 : vector<8x1xf32>
    %73 = arith.mulf %67, %67 : vector<8x1xf32>
    %74 = arith.subf %72, %73 : vector<8x1xf32>
    %cst_33 = arith.constant 0.000000e+00 : f32
    %75 = vector.broadcast %cst_33 : f32 to vector<8x1xf32>
    %76 = arith.maximumf %74, %75 : vector<8x1xf32>
    %77 = vector.broadcast %67 : vector<8x1xf32> to vector<8x512xf32>
    %78 = arith.subf %63, %77 : vector<8x512xf32>
    %cst_34 = arith.constant 9.99999974E-6 : f32
    %79 = vector.broadcast %cst_34 : f32 to vector<8x1xf32>
    %80 = arith.addf %76, %79 : vector<8x1xf32>
    %81 = math.rsqrt %80 : vector<8x1xf32>
    %82 = vector.broadcast %81 : vector<8x1xf32> to vector<8x512xf32>
    %83 = arith.mulf %78, %82 : vector<8x512xf32>
    %84 = vector.broadcast %58 : vector<1x512xf32> to vector<8x512xf32>
    %85 = arith.mulf %83, %84 : vector<8x512xf32>
    %86 = vector.broadcast %59 : vector<1x512xf32> to vector<8x512xf32>
    %87 = arith.addf %85, %86 : vector<8x512xf32>
    %cst_35 = arith.constant 2.000000e-01 : f32
    %88 = vector.broadcast %cst_35 : f32 to vector<8x512xf32>
    %89 = arith.mulf %88, %87 : vector<8x512xf32>
    %90 = arith.maximumf %87, %89 : vector<8x512xf32>
    %91 = arith.truncf %90 : vector<8x512xf32> to vector<8x512xbf16>
    %c0_36 = arith.constant 0 : index
    %c0_37 = arith.constant 0 : index
    %92 = vector.load %arg7[%c0_36, %c0_37] : memref<3x256xf32, #tpu.memory_space<vmem>>, vector<1x256xf32>
    %c1_38 = arith.constant 1 : index
    %c0_39 = arith.constant 0 : index
    %93 = vector.load %arg7[%c1_38, %c0_39] : memref<3x256xf32, #tpu.memory_space<vmem>>, vector<1x256xf32>
    %c2_40 = arith.constant 2 : index
    %c0_41 = arith.constant 0 : index
    %94 = vector.load %arg7[%c2_40, %c0_41] : memref<3x256xf32, #tpu.memory_space<vmem>>, vector<1x256xf32>
    %c0_42 = arith.constant 0 : index
    %c0_43 = arith.constant 0 : index
    %95 = vector.load %arg6[%c0_42, %c0_43] : memref<512x256xbf16, #tpu.memory_space<vmem>>, vector<512x256xbf16>
    %cst_44 = arith.constant dense<0.000000e+00> : vector<8x256xf32>
    %96 = tpu.matmul %91, %95, %cst_44 {dimension_numbers = #tpu.dot_dimension_numbers<[1], [0], [0], [1], [0, 0, 1, 1], [], []>} : vector<8x512xbf16>, vector<512x256xbf16>, vector<8x256xf32> -> vector<8x256xf32>
    %97 = vector.broadcast %92 : vector<1x256xf32> to vector<8x256xf32>
    %98 = arith.addf %96, %97 : vector<8x256xf32>
    %cst_45 = arith.constant dense<0.000000e+00> : vector<8xf32>
    %99 = vector.multi_reduction <add>, %98, %cst_45 [1] : vector<8x256xf32> to vector<8xf32>
    %100 = vector.shape_cast %99 : vector<8xf32> to vector<8x1xf32>
    %cst_46 = arith.constant 2.560000e+02 : f32
    %101 = vector.broadcast %cst_46 : f32 to vector<8x1xf32>
    %102 = arith.divf %100, %101 : vector<8x1xf32>
    %103 = arith.mulf %98, %98 : vector<8x256xf32>
    %cst_47 = arith.constant dense<0.000000e+00> : vector<8xf32>
    %104 = vector.multi_reduction <add>, %103, %cst_47 [1] : vector<8x256xf32> to vector<8xf32>
    %105 = vector.shape_cast %104 : vector<8xf32> to vector<8x1xf32>
    %cst_48 = arith.constant 2.560000e+02 : f32
    %106 = vector.broadcast %cst_48 : f32 to vector<8x1xf32>
    %107 = arith.divf %105, %106 : vector<8x1xf32>
    %108 = arith.mulf %102, %102 : vector<8x1xf32>
    %109 = arith.subf %107, %108 : vector<8x1xf32>
    %cst_49 = arith.constant 0.000000e+00 : f32
    %110 = vector.broadcast %cst_49 : f32 to vector<8x1xf32>
    %111 = arith.maximumf %109, %110 : vector<8x1xf32>
    %112 = vector.broadcast %102 : vector<8x1xf32> to vector<8x256xf32>
    %113 = arith.subf %98, %112 : vector<8x256xf32>
    %cst_50 = arith.constant 9.99999974E-6 : f32
    %114 = vector.broadcast %cst_50 : f32 to vector<8x1xf32>
    %115 = arith.addf %111, %114 : vector<8x1xf32>
    %116 = math.rsqrt %115 : vector<8x1xf32>
    %117 = vector.broadcast %116 : vector<8x1xf32> to vector<8x256xf32>
    %118 = arith.mulf %113, %117 : vector<8x256xf32>
    %119 = vector.broadcast %93 : vector<1x256xf32> to vector<8x256xf32>
    %120 = arith.mulf %118, %119 : vector<8x256xf32>
    %121 = vector.broadcast %94 : vector<1x256xf32> to vector<8x256xf32>
    %122 = arith.addf %120, %121 : vector<8x256xf32>
    %cst_51 = arith.constant 2.000000e-01 : f32
    %123 = vector.broadcast %cst_51 : f32 to vector<8x256xf32>
    %124 = arith.mulf %123, %122 : vector<8x256xf32>
    %125 = arith.maximumf %122, %124 : vector<8x256xf32>
    %126 = arith.truncf %125 : vector<8x256xf32> to vector<8x256xbf16>
    %c0_52 = arith.constant 0 : index
    %c0_53 = arith.constant 0 : index
    %127 = vector.load %arg9[%c0_52, %c0_53] : memref<3x128xf32, #tpu.memory_space<vmem>>, vector<1x128xf32>
    %c1_54 = arith.constant 1 : index
    %c0_55 = arith.constant 0 : index
    %128 = vector.load %arg9[%c1_54, %c0_55] : memref<3x128xf32, #tpu.memory_space<vmem>>, vector<1x128xf32>
    %c2_56 = arith.constant 2 : index
    %c0_57 = arith.constant 0 : index
    %129 = vector.load %arg9[%c2_56, %c0_57] : memref<3x128xf32, #tpu.memory_space<vmem>>, vector<1x128xf32>
    %c0_58 = arith.constant 0 : index
    %c0_59 = arith.constant 0 : index
    %130 = vector.load %arg8[%c0_58, %c0_59] : memref<256x128xbf16, #tpu.memory_space<vmem>>, vector<256x128xbf16>
    %cst_60 = arith.constant dense<0.000000e+00> : vector<8x128xf32>
    %131 = tpu.matmul %126, %130, %cst_60 {dimension_numbers = #tpu.dot_dimension_numbers<[1], [0], [0], [1], [0, 0, 1, 1], [], []>} : vector<8x256xbf16>, vector<256x128xbf16>, vector<8x128xf32> -> vector<8x128xf32>
    %132 = vector.broadcast %127 : vector<1x128xf32> to vector<8x128xf32>
    %133 = arith.addf %131, %132 : vector<8x128xf32>
    %cst_61 = arith.constant dense<0.000000e+00> : vector<8xf32>
    %134 = vector.multi_reduction <add>, %133, %cst_61 [1] : vector<8x128xf32> to vector<8xf32>
    %135 = vector.shape_cast %134 : vector<8xf32> to vector<8x1xf32>
    %cst_62 = arith.constant 1.280000e+02 : f32
    %136 = vector.broadcast %cst_62 : f32 to vector<8x1xf32>
    %137 = arith.divf %135, %136 : vector<8x1xf32>
    %138 = arith.mulf %133, %133 : vector<8x128xf32>
    %cst_63 = arith.constant dense<0.000000e+00> : vector<8xf32>
    %139 = vector.multi_reduction <add>, %138, %cst_63 [1] : vector<8x128xf32> to vector<8xf32>
    %140 = vector.shape_cast %139 : vector<8xf32> to vector<8x1xf32>
    %cst_64 = arith.constant 1.280000e+02 : f32
    %141 = vector.broadcast %cst_64 : f32 to vector<8x1xf32>
    %142 = arith.divf %140, %141 : vector<8x1xf32>
    %143 = arith.mulf %137, %137 : vector<8x1xf32>
    %144 = arith.subf %142, %143 : vector<8x1xf32>
    %cst_65 = arith.constant 0.000000e+00 : f32
    %145 = vector.broadcast %cst_65 : f32 to vector<8x1xf32>
    %146 = arith.maximumf %144, %145 : vector<8x1xf32>
    %147 = vector.broadcast %137 : vector<8x1xf32> to vector<8x128xf32>
    %148 = arith.subf %133, %147 : vector<8x128xf32>
    %cst_66 = arith.constant 9.99999974E-6 : f32
    %149 = vector.broadcast %cst_66 : f32 to vector<8x1xf32>
    %150 = arith.addf %146, %149 : vector<8x1xf32>
    %151 = math.rsqrt %150 : vector<8x1xf32>
    %152 = vector.broadcast %151 : vector<8x1xf32> to vector<8x128xf32>
    %153 = arith.mulf %148, %152 : vector<8x128xf32>
    %154 = vector.broadcast %128 : vector<1x128xf32> to vector<8x128xf32>
    %155 = arith.mulf %153, %154 : vector<8x128xf32>
    %156 = vector.broadcast %129 : vector<1x128xf32> to vector<8x128xf32>
    %157 = arith.addf %155, %156 : vector<8x128xf32>
    %cst_67 = arith.constant 2.000000e-01 : f32
    %158 = vector.broadcast %cst_67 : f32 to vector<8x128xf32>
    %159 = arith.mulf %158, %157 : vector<8x128xf32>
    %160 = arith.maximumf %157, %159 : vector<8x128xf32>
    %161 = arith.truncf %160 : vector<8x128xf32> to vector<8x128xbf16>
    %c0_68 = arith.constant 0 : index
    %c0_69 = arith.constant 0 : index
    %162 = vector.load %arg10[%c0_68, %c0_69] : memref<128x128xbf16, #tpu.memory_space<vmem>>, vector<128x128xbf16>
    %cst_70 = arith.constant dense<0.000000e+00> : vector<8x128xf32>
    %163 = tpu.matmul %161, %162, %cst_70 {dimension_numbers = #tpu.dot_dimension_numbers<[1], [0], [0], [1], [0, 0, 1, 1], [], []>} : vector<8x128xbf16>, vector<128x128xbf16>, vector<8x128xf32> -> vector<8x128xf32>
    %c0_71 = arith.constant 0 : index
    %c0_72 = arith.constant 0 : index
    %164 = vector.load %arg11[%c0_71, %c0_72] : memref<1x128xf32, #tpu.memory_space<vmem>>, vector<1x128xf32>
    %165 = vector.broadcast %164 : vector<1x128xf32> to vector<8x128xf32>
    %166 = arith.addf %163, %165 : vector<8x128xf32>
    %cst_73 = arith.constant dense<0xFF800000> : vector<8xf32>
    %167 = vector.multi_reduction <maximumf>, %166, %cst_73 [1] : vector<8x128xf32> to vector<8xf32>
    %168 = vector.shape_cast %167 : vector<8xf32> to vector<8x1xf32>
    %169 = vector.broadcast %168 : vector<8x1xf32> to vector<8x128xf32>
    %170 = arith.subf %166, %169 : vector<8x128xf32>
    %171 = math.exp %170 : vector<8x128xf32>
    %cst_74 = arith.constant dense<0.000000e+00> : vector<8xf32>
    %172 = vector.multi_reduction <add>, %171, %cst_74 [1] : vector<8x128xf32> to vector<8xf32>
    %173 = vector.shape_cast %172 : vector<8xf32> to vector<8x1xf32>
    %174 = vector.broadcast %173 : vector<8x1xf32> to vector<8x128xf32>
    %175 = arith.divf %171, %174 : vector<8x128xf32>
    %c0_75 = arith.constant 0 : index
    %c0_76 = arith.constant 0 : index
    %176 = vector.load %arg12[%c0_75, %c0_76] : memref<8x128xf32, #tpu.memory_space<vmem>>, vector<8x128xf32>
    tpu.vector_store %arg12[%c0_75, %c0_76], %175 {strides = array<i32>} : memref<8x128xf32, #tpu.memory_space<vmem>>, vector<8x128xf32>,
    return
  }
  func.func @transform_0(%arg0: i32) -> (i32, i32) {
    %c0_i32 = arith.constant 0 : i32
    %c0_i32_0 = arith.constant 0 : i32
    return %arg0, %c0_i32 : i32, i32
  }
  func.func @transform_1(%arg0: i32) -> (i32, i32) {
    %c0_i32 = arith.constant 0 : i32
    %c0_i32_0 = arith.constant 0 : i32
    %c0_i32_1 = arith.constant 0 : i32
    return %c0_i32, %c0_i32_0 : i32, i32
  }
  func.func @transform_2(%arg0: i32) -> (i32, i32) {
    %c0_i32 = arith.constant 0 : i32
    %c0_i32_0 = arith.constant 0 : i32
    %c0_i32_1 = arith.constant 0 : i32
    return %c0_i32, %c0_i32_0 : i32, i32
  }
  func.func @transform_3(%arg0: i32) -> (i32, i32) {
    %c0_i32 = arith.constant 0 : i32
    %c0_i32_0 = arith.constant 0 : i32
    %c0_i32_1 = arith.constant 0 : i32
    return %c0_i32, %c0_i32_0 : i32, i32
  }
  func.func @transform_4(%arg0: i32) -> (i32, i32) {
    %c0_i32 = arith.constant 0 : i32
    %c0_i32_0 = arith.constant 0 : i32
    %c0_i32_1 = arith.constant 0 : i32
    return %c0_i32, %c0_i32_0 : i32, i32
  }
  func.func @transform_5(%arg0: i32) -> (i32, i32) {
    %c0_i32 = arith.constant 0 : i32
    %c0_i32_0 = arith.constant 0 : i32
    %c0_i32_1 = arith.constant 0 : i32
    return %c0_i32, %c0_i32_0 : i32, i32
  }
  func.func @transform_6(%arg0: i32) -> (i32, i32) {
    %c0_i32 = arith.constant 0 : i32
    %c0_i32_0 = arith.constant 0 : i32
    %c0_i32_1 = arith.constant 0 : i32
    return %c0_i32, %c0_i32_0 : i32, i32
  }
  func.func @transform_7(%arg0: i32) -> (i32, i32) {
    %c0_i32 = arith.constant 0 : i32
    %c0_i32_0 = arith.constant 0 : i32
    %c0_i32_1 = arith.constant 0 : i32
    return %c0_i32, %c0_i32_0 : i32, i32
  }
  func.func @transform_8(%arg0: i32) -> (i32, i32) {
    %c0_i32 = arith.constant 0 : i32
    %c0_i32_0 = arith.constant 0 : i32
    %c0_i32_1 = arith.constant 0 : i32
    return %c0_i32, %c0_i32_0 : i32, i32
  }
  func.func @transform_9(%arg0: i32) -> (i32, i32) {
    %c0_i32 = arith.constant 0 : i32
    %c0_i32_0 = arith.constant 0 : i32
    %c0_i32_1 = arith.constant 0 : i32
    return %c0_i32, %c0_i32_0 : i32, i32
  }
  func.func @transform_10(%arg0: i32) -> (i32, i32) {
    %c0_i32 = arith.constant 0 : i32
    %c0_i32_0 = arith.constant 0 : i32
    %c0_i32_1 = arith.constant 0 : i32
    return %c0_i32, %c0_i32_0 : i32, i32
  }
  func.func @transform_11(%arg0: i32) -> (i32, i32) {
    %c0_i32 = arith.constant 0 : i32
    %c0_i32_0 = arith.constant 0 : i32
    return %arg0, %c0_i32 : i32, i32
  }
}

</mosaic_0001>

<llo_original>
// kernel: refined_ann_forward.1
$region0: #{refined_ann_forward.1}
  #allocation0 [shape = 'u32[]', space=smem, size = 0x4, offset = 0x4, fixed_abs, tag = 'smem constant byte address 0x4 - core index']
  #allocation1 [shape = 'u32[72,128]{1,0:T(1,128)}', space=vmem, size = 0x9000, scoped, tag = 'internal scratch']
  %s0 = inlined_call_operand.vmem [shape: f32[8,64], index: 0, kind: input, shape index: {}]
  %s1 = inlined_call_operand.vmem [shape: bf16[64,256], index: 1, kind: input, shape index: {}]
  %s2 = inlined_call_operand.vmem [shape: f32[3,256], index: 2, kind: input, shape index: {}]
  %s3 = inlined_call_operand.vmem [shape: bf16[256,512], index: 3, kind: input, shape index: {}]
  %s4 = inlined_call_operand.vmem [shape: f32[3,512], index: 4, kind: input, shape index: {}]
  %s5 = inlined_call_operand.vmem [shape: bf16[512,256], index: 5, kind: input, shape index: {}]
  %s6 = inlined_call_operand.vmem [shape: f32[3,256], index: 6, kind: input, shape index: {}]
  %s7 = inlined_call_operand.vmem [shape: bf16[256,128], index: 7, kind: input, shape index: {}]
  %s8 = inlined_call_operand.vmem [shape: f32[3,128], index: 8, kind: input, shape index: {}]
  %s9 = inlined_call_operand.vmem [shape: bf16[128,128], index: 9, kind: input, shape index: {}]
  %s10 = inlined_call_operand.vmem [shape: f32[1,128], index: 10, kind: input, shape index: {}]
  %s11 = inlined_call_operand.hbm [shape: f32[8,128], index: 11, kind: output, shape index: {}]
  %s12 = sld [smem:[#allocation0]]
  $region54: #{refined_ann_forward.1} parent=0
    _
  %s14 = ssub.s32 1, %s12
  %s15 = scalar_select 0, %s14, %s12
  $region1: #{refined_ann_forward.1} parent=0
    #allocation2 [shape = 'u8[4096]{0}', space=vmem, size = 0x1000, scoped, tag = 'output window, operand 0, single buffered']
    #allocation3 [shape = 's32[1]{0}', space=sflag, size = 0x4, scoped, tag = 'scoped memory for refined_ann_forward.1']
    %16 = vsyncpa [#allocation3], 0
    // Predicated region
    $region2: #{refined_ann_forward.1} parent=1 // pred_check
      _
    $region3: #{refined_ann_forward.1} parent=1 // pred_check_branch
      %18 = sbr.rel (0) target = $region5
    $region4: #{refined_ann_forward.1} parent=1 // pred_region
      _
    $region5: #{refined_ann_forward.1} parent=1 // pred_fallthru
      _
    // Predicated region
    $region6: #{refined_ann_forward.1} parent=1 // pred_check
      _
    $region7: #{refined_ann_forward.1} parent=1 // pred_check_branch
      %20 = sbr.rel (0) target = $region9
    $region8: #{refined_ann_forward.1} parent=1 // pred_region
      _
    $region9: #{refined_ann_forward.1} parent=1 // pred_fallthru
      _
    // Predicated region
    $region10: #{refined_ann_forward.1} parent=1 // pred_check
      _
    $region11: #{refined_ann_forward.1} parent=1 // pred_check_branch
      %22 = sbr.rel (0) target = $region13
    $region12: #{refined_ann_forward.1} parent=1 // pred_region
      _
    $region13: #{refined_ann_forward.1} parent=1 // pred_fallthru
      _
    // Predicated region
    $region14: #{refined_ann_forward.1} parent=1 // pred_check
      _
    $region15: #{refined_ann_forward.1} parent=1 // pred_check_branch
      %24 = sbr.rel (0) target = $region17
    $region16: #{refined_ann_forward.1} parent=1 // pred_region
      _
    $region17: #{refined_ann_forward.1} parent=1 // pred_fallthru
      _
    // Predicated region
    $region18: #{refined_ann_forward.1} parent=1 // pred_check
      _
    $region19: #{refined_ann_forward.1} parent=1 // pred_check_branch
      %26 = sbr.rel (0) target = $region21
    $region20: #{refined_ann_forward.1} parent=1 // pred_region
      _
    $region21: #{refined_ann_forward.1} parent=1 // pred_fallthru
      _
    // Predicated region
    $region22: #{refined_ann_forward.1} parent=1 // pred_check
      _
    $region23: #{refined_ann_forward.1} parent=1 // pred_check_branch
      %28 = sbr.rel (0) target = $region25
    $region24: #{refined_ann_forward.1} parent=1 // pred_region
      _
    $region25: #{refined_ann_forward.1} parent=1 // pred_fallthru
      _
    // Predicated region
    $region26: #{refined_ann_forward.1} parent=1 // pred_check
      _
    $region27: #{refined_ann_forward.1} parent=1 // pred_check_branch
      %30 = sbr.rel (0) target = $region29
    $region28: #{refined_ann_forward.1} parent=1 // pred_region
      _
    $region29: #{refined_ann_forward.1} parent=1 // pred_fallthru
      _
    // Predicated region
    $region30: #{refined_ann_forward.1} parent=1 // pred_check
      _
    $region31: #{refined_ann_forward.1} parent=1 // pred_check_branch
      %32 = sbr.rel (0) target = $region33
    $region32: #{refined_ann_forward.1} parent=1 // pred_region
      _
    $region33: #{refined_ann_forward.1} parent=1 // pred_fallthru
      _
    // Predicated region
    $region34: #{refined_ann_forward.1} parent=1 // pred_check
      _
    $region35: #{refined_ann_forward.1} parent=1 // pred_check_branch
      %34 = sbr.rel (0) target = $region37
    $region36: #{refined_ann_forward.1} parent=1 // pred_region
      _
    $region37: #{refined_ann_forward.1} parent=1 // pred_fallthru
      _
    // Predicated region
    $region38: #{refined_ann_forward.1} parent=1 // pred_check
      _
    $region39: #{refined_ann_forward.1} parent=1 // pred_check_branch
      %36 = sbr.rel (0) target = $region41
    $region40: #{refined_ann_forward.1} parent=1 // pred_region
      _
    $region41: #{refined_ann_forward.1} parent=1 // pred_fallthru
      _
    // Predicated region
    $region42: #{refined_ann_forward.1} parent=1 // pred_check
      _
    $region43: #{refined_ann_forward.1} parent=1 // pred_check_branch
      %38 = sbr.rel (0) target = $region45
    $region44: #{refined_ann_forward.1} parent=1 // pred_region
      _
    $region45: #{refined_ann_forward.1} parent=1 // pred_fallthru
      _
    %v40 = vld [vmem:[%s0] sm:$0xff]
    %vm41 = vcmask 523264
    %v42 = vsel %vm41, %v40, 0.0
    %43 = vadd.xlane.f32.xlu0 %v42
    %v44 = vpop.xlane.xlu0 %43
    %v45 = vrcp.pop 64.0
    %v46 = vmul.f32 64.0, %v45
    %v47 = vsub.f32 1.0, %v46
    %v48 = vmul.f32 %v45, %v47
    %v49 = vadd.f32 %v45, %v48
    %vm50 = vweird.f32 %v45
    %v51 = vsel %vm50, %v45, %v49
    %v52 = vmul.f32 %v44, %v51
    %v53 = vmul.f32 %v40, %v40
    %v54 = vsel %vm41, %v53, 0.0
    %55 = vadd.xlane.f32.xlu0 %v54
    %v56 = vpop.xlane.xlu0 %55
    %v57 = vmul.f32 %v56, %v51
    %v58 = vmul.f32 %v52, %v52
    %v59 = vsub.f32 %v57, %v58
    %v60 = vmax.f32 %v59, 0.0
    %v61 = vsub.f32 %v40, %v52
    %v62 = vadd.f32 %v60, 1e-05
    %v63 = vrsqrt.pop %v62
    %v64 = vmul.f32 %v63, %v62
    %v65 = vmul.f32 %v64, %v63
    %v66 = vmul.f32 0.5, %v65
    %v67 = vsub.f32 1.5, %v66
    %v68 = vmul.f32 %v63, %v67
    %vm69 = vweird.f32 %v62
    %vm70 = vweird.f32 %v63
    %vm71 = vmor %vm69, %vm70
    %v72 = vsel %vm71, %v63, %v68
    %v73 = vmul.f32 %v61, %v72
    %v74 = vpack.c.bf16 %v73, %v73
    %v75 = vld [vmem:[%s2] ss:$4 sm:$0x3]
    %s76 = scalar_lea.vmem %s2, 1
    %v77 = vld [vmem:[%s76] ss:$4 sm:$0x3]
    %s78 = scalar_lea.vmem %s2, 2
    %v79 = vld [vmem:[%s78] ss:$4 sm:$0x3]
    %v80 = vld [vmem:[%s1] sm:$0xff]
    %v81 = vld [vmem:[%s1 + $0x8] sm:$0xff]
    %v82 = vld [vmem:[%s1 + $0x10] sm:$0xff]
    %v83 = vld [vmem:[%s1 + $0x18] sm:$0xff]
    %v84 = vld [vmem:[%s1 + $0x20] sm:$0xff]
    %v85 = vld [vmem:[%s1 + $0x28] sm:$0xff]
    %v86 = vld [vmem:[%s1 + $0x30] sm:$0xff]
    %v87 = vld [vmem:[%s1 + $0x38] sm:$0xff]
    %v89 = vperm.slane %v75, 0
    %v90 = vperm.slane %v75, 1
    %v101 = vunpack.c.l.b16 %v80
    %v102 = vunpack.c.h.b16 %v80
    %v103 = vunpack.c.l.b16 %v81
    %v104 = vunpack.c.h.b16 %v81
    %v105 = vunpack.c.l.b16 %v82
    %v106 = vunpack.c.h.b16 %v82
    %v107 = vunpack.c.l.b16 %v83
    %v108 = vunpack.c.h.b16 %v83
    %v109 = vunpack.c.l.b16 %v84
    %v110 = vunpack.c.h.b16 %v84
    %v111 = vunpack.c.l.b16 %v85
    %v112 = vunpack.c.h.b16 %v85
    %v113 = vunpack.c.l.b16 %v86
    %v114 = vunpack.c.h.b16 %v86
    %v115 = vunpack.c.l.b16 %v87
    %v116 = vunpack.c.h.b16 %v87
    %v117 = vpack.c.b16 %v103, %v101
    %v118 = vpack.c.b16 %v104, %v102
    %v119 = vpack.c.b16 %v107, %v105
    %v120 = vpack.c.b16 %v108, %v106
    %v121 = vpack.c.b16 %v111, %v109
    %v122 = vpack.c.b16 %v112, %v110
    %v123 = vpack.c.b16 %v115, %v113
    %v124 = vpack.c.b16 %v116, %v114
    %v134 = vsel %vm41, %v74, 0
    %136 = vmatpush.bf16.msra.mxu0 0
    %137 = vmatpush.bf16.msra.mxu0 0
    %138 = vmatpush.bf16.msra.mxu0 0
    %139 = vmatpush.bf16.msra.mxu0 0
    %140 = vmatpush.bf16.msra.mxu0 %v123
    %141 = vmatpush.bf16.msra.mxu0 %v121
    %142 = vmatpush.bf16.msra.mxu0 %v119
    %143 = vmatpush.bf16.msra.mxu0 %v117
    %144 = vmatmul.bf16.gmra.mxu0 %v134
    %v145 = vpop.f32.mrf.mxu0
    %v146 = vadd.f32 %v89, %v145
    %v147 = vpop.f32.mrf.mxu0
    %148 = vdwg.mxu0
    %149 = vmatpush.bf16.msra.mxu0 0
    %150 = vmatpush.bf16.msra.mxu0 0
    %151 = vmatpush.bf16.msra.mxu0 0
    %152 = vmatpush.bf16.msra.mxu0 0
    %153 = vmatpush.bf16.msra.mxu0 %v124
    %154 = vmatpush.bf16.msra.mxu0 %v122
    %155 = vmatpush.bf16.msra.mxu0 %v120
    %156 = vmatpush.bf16.msra.mxu0 %v118
    %157 = vmatmul.bf16.gmra.mxu0 %v134
    %v158 = vpop.f32.mrf.mxu0
    %v159 = vadd.f32 %v90, %v158
    %v160 = vpop.f32.mrf.mxu0
    %161 = vdwg.mxu0
    %v162 = vadd.f32 %v146, %v159
    %163 = vadd.xlane.f32.xlu0 %v162
    %v164 = vpop.xlane.xlu0 %163
    %v165 = vrcp.pop 256.0
    %v166 = vmul.f32 256.0, %v165
    %v167 = vsub.f32 1.0, %v166
    %v168 = vmul.f32 %v165, %v167
    %v169 = vadd.f32 %v165, %v168
    %vm170 = vweird.f32 %v165
    %v171 = vsel %vm170, %v165, %v169
    %v172 = vmul.f32 %v164, %v171
    %v173 = vmul.f32 %v146, %v146
    %v174 = vmul.f32 %v159, %v159
    %v175 = vadd.f32 %v173, %v174
    %176 = vadd.xlane.f32.xlu0 %v175
    %v177 = vpop.xlane.xlu0 %176
    %v178 = vmul.f32 %v177, %v171
    %v179 = vmul.f32 %v172, %v172
    %v180 = vsub.f32 %v178, %v179
    %v181 = vmax.f32 %v180, 0.0
    %v182 = vsub.f32 %v146, %v172
    %v183 = vsub.f32 %v159, %v172
    %v184 = vadd.f32 %v181, 1e-05
    %v185 = vrsqrt.pop %v184
    %v186 = vmul.f32 %v185, %v184
    %v187 = vmul.f32 %v186, %v185
    %v188 = vmul.f32 0.5, %v187
    %v189 = vsub.f32 1.5, %v188
    %v190 = vmul.f32 %v185, %v189
    %vm191 = vweird.f32 %v184
    %vm192 = vweird.f32 %v185
    %vm193 = vmor %vm191, %vm192
    %v194 = vsel %vm193, %v185, %v190
    %v195 = vmul.f32 %v182, %v194
    %v196 = vmul.f32 %v183, %v194
    %v198 = vperm.slane %v77, 0
    %v199 = vperm.slane %v77, 1
    %v202 = vmul.f32 %v195, %v198
    %v203 = vmul.f32 %v196, %v199
    %v205 = vperm.slane %v79, 0
    %v206 = vperm.slane %v79, 1
    %v209 = vadd.f32 %v202, %v205
    %v210 = vadd.f32 %v203, %v206
    %v211 = vmul.f32 %v209, 0.2
    %v212 = vmul.f32 %v210, 0.2
    %v213 = vmax.f32 %v209, %v211
    %v214 = vmax.f32 %v210, %v212
    %v215 = vpack.c.bf16 %v213, %v213
    %v216 = vpack.c.bf16 %v214, %v214
    %v217 = vld [vmem:[%s4] ss:$4 sm:$0xf]
    %s218 = scalar_lea.vmem %s4, 1
    %v219 = vld [vmem:[%s218] ss:$4 sm:$0xf]
    %s220 = scalar_lea.vmem %s4, 2
    %v221 = vld [vmem:[%s220] ss:$4 sm:$0xf]
    %v222 = vld [vmem:[%s3] sm:$0xff]
    %v223 = vld [vmem:[%s3 + $0x8] sm:$0xff]
    %v224 = vld [vmem:[%s3 + $0x10] sm:$0xff]
    %v225 = vld [vmem:[%s3 + $0x18] sm:$0xff]
    %v226 = vld [vmem:[%s3 + $0x20] sm:$0xff]
    %v227 = vld [vmem:[%s3 + $0x28] sm:$0xff]
    %v228 = vld [vmem:[%s3 + $0x30] sm:$0xff]
    %v229 = vld [vmem:[%s3 + $0x38] sm:$0xff]
    %v230 = vld [vmem:[%s3 + $0x40] sm:$0xff]
    %v231 = vld [vmem:[%s3 + $0x48] sm:$0xff]
    %v232 = vld [vmem:[%s3 + $0x50] sm:$0xff]
    %v233 = vld [vmem:[%s3 + $0x58] sm:$0xff]
    %v234 = vld [vmem:[%s3 + $0x60] sm:$0xff]
    %v235 = vld [vmem:[%s3 + $0x68] sm:$0xff]
    %v236 = vld [vmem:[%s3 + $0x70] sm:$0xff]
    %v237 = vld [vmem:[%s3 + $0x78] sm:$0xff]
    %v238 = vld [vmem:[%s3 + $0x80] sm:$0xff]
    %v239 = vld [vmem:[%s3 + $0x88] sm:$0xff]
    %v240 = vld [vmem:[%s3 + $0x90] sm:$0xff]
    %v241 = vld [vmem:[%s3 + $0x98] sm:$0xff]
    %v242 = vld [vmem:[%s3 + $0xa0] sm:$0xff]
    %v243 = vld [vmem:[%s3 + $0xa8] sm:$0xff]
    %v244 = vld [vmem:[%s3 + $0xb0] sm:$0xff]
    %v245 = vld [vmem:[%s3 + $0xb8] sm:$0xff]
    %v246 = vld [vmem:[%s3 + $0xc0] sm:$0xff]
    %v247 = vld [vmem:[%s3 + $0xc8] sm:$0xff]
    %v248 = vld [vmem:[%s3 + $0xd0] sm:$0xff]
    %v249 = vld [vmem:[%s3 + $0xd8] sm:$0xff]
    %v250 = vld [vmem:[%s3 + $0xe0] sm:$0xff]
    %v251 = vld [vmem:[%s3 + $0xe8] sm:$0xff]
    %v252 = vld [vmem:[%s3 + $0xf0] sm:$0xff]
    %v253 = vld [vmem:[%s3 + $0xf8] sm:$0xff]
    %v254 = vld [vmem:[%s3 + $0x100] sm:$0xff]
    %v255 = vld [vmem:[%s3 + $0x108] sm:$0xff]
    %v256 = vld [vmem:[%s3 + $0x110] sm:$0xff]
    %v257 = vld [vmem:[%s3 + $0x118] sm:$0xff]
    %v258 = vld [vmem:[%s3 + $0x120] sm:$0xff]
    %v259 = vld [vmem:[%s3 + $0x128] sm:$0xff]
    %v260 = vld [vmem:[%s3 + $0x130] sm:$0xff]
    %v261 = vld [vmem:[%s3 + $0x138] sm:$0xff]
    %v262 = vld [vmem:[%s3 + $0x140] sm:$0xff]
    %v263 = vld [vmem:[%s3 + $0x148] sm:$0xff]
    %v264 = vld [vmem:[%s3 + $0x150] sm:$0xff]
    %v265 = vld [vmem:[%s3 + $0x158] sm:$0xff]
    %v266 = vld [vmem:[%s3 + $0x160] sm:$0xff]
    %v267 = vld [vmem:[%s3 + $0x168] sm:$0xff]
    %v268 = vld [vmem:[%s3 + $0x170] sm:$0xff]
    %v269 = vld [vmem:[%s3 + $0x178] sm:$0xff]
    %v270 = vld [vmem:[%s3 + $0x180] sm:$0xff]
    %v271 = vld [vmem:[%s3 + $0x188] sm:$0xff]
    %v272 = vld [vmem:[%s3 + $0x190] sm:$0xff]
    %v273 = vld [vmem:[%s3 + $0x198] sm:$0xff]
    %v274 = vld [vmem:[%s3 + $0x1a0] sm:$0xff]
    %v275 = vld [vmem:[%s3 + $0x1a8] sm:$0xff]
    %v276 = vld [vmem:[%s3 + $0x1b0] sm:$0xff]
    %v277 = vld [vmem:[%s3 + $0x1b8] sm:$0xff]
    %v278 = vld [vmem:[%s3 + $0x1c0] sm:$0xff]
    %v279 = vld [vmem:[%s3 + $0x1c8] sm:$0xff]
    %v280 = vld [vmem:[%s3 + $0x1d0] sm:$0xff]
    %v281 = vld [vmem:[%s3 + $0x1d8] sm:$0xff]
    %v282 = vld [vmem:[%s3 + $0x1e0] sm:$0xff]
    %v283 = vld [vmem:[%s3 + $0x1e8] sm:$0xff]
    %v284 = vld [vmem:[%s3 + $0x1f0] sm:$0xff]
    %v285 = vld [vmem:[%s3 + $0x1f8] sm:$0xff]
    %v287 = vperm.slane %v217, 0
    %v288 = vperm.slane %v217, 1
    %v289 = vperm.slane %v217, 2
    %v290 = vperm.slane %v217, 3
    %v359 = vunpack.c.l.b16 %v222
    %v360 = vunpack.c.h.b16 %v222
    %v361 = vunpack.c.l.b16 %v223
    %v362 = vunpack.c.h.b16 %v223
    %v363 = vunpack.c.l.b16 %v224
    %v364 = vunpack.c.h.b16 %v224
    %v365 = vunpack.c.l.b16 %v225
    %v366 = vunpack.c.h.b16 %v225
    %v367 = vunpack.c.l.b16 %v226
    %v368 = vunpack.c.h.b16 %v226
    %v369 = vunpack.c.l.b16 %v227
    %v370 = vunpack.c.h.b16 %v227
    %v371 = vunpack.c.l.b16 %v228
    %v372 = vunpack.c.h.b16 %v228
    %v373 = vunpack.c.l.b16 %v229
    %v374 = vunpack.c.h.b16 %v229
    %v375 = vunpack.c.l.b16 %v230
    %v376 = vunpack.c.h.b16 %v230
    %v377 = vunpack.c.l.b16 %v231
    %v378 = vunpack.c.h.b16 %v231
    %v379 = vunpack.c.l.b16 %v232
    %v380 = vunpack.c.h.b16 %v232
    %v381 = vunpack.c.l.b16 %v233
    %v382 = vunpack.c.h.b16 %v233
    %v383 = vunpack.c.l.b16 %v234
    %v384 = vunpack.c.h.b16 %v234
    %v385 = vunpack.c.l.b16 %v235
    %v386 = vunpack.c.h.b16 %v235
    %v387 = vunpack.c.l.b16 %v236
    %v388 = vunpack.c.h.b16 %v236
    %v389 = vunpack.c.l.b16 %v237
    %v390 = vunpack.c.h.b16 %v237
    %v391 = vunpack.c.l.b16 %v238
    %v392 = vunpack.c.h.b16 %v238
    %v393 = vunpack.c.l.b16 %v239
    %v394 = vunpack.c.h.b16 %v239
    %v395 = vunpack.c.l.b16 %v240
    %v396 = vunpack.c.h.b16 %v240
    %v397 = vunpack.c.l.b16 %v241
    %v398 = vunpack.c.h.b16 %v241
    %v399 = vunpack.c.l.b16 %v242
    %v400 = vunpack.c.h.b16 %v242
    %v401 = vunpack.c.l.b16 %v243
    %v402 = vunpack.c.h.b16 %v243
    %v403 = vunpack.c.l.b16 %v244
    %v404 = vunpack.c.h.b16 %v244
    %v405 = vunpack.c.l.b16 %v245
    %v406 = vunpack.c.h.b16 %v245
    %v407 = vunpack.c.l.b16 %v246
    %v408 = vunpack.c.h.b16 %v246
    %v409 = vunpack.c.l.b16 %v247
    %v410 = vunpack.c.h.b16 %v247
    %v411 = vunpack.c.l.b16 %v248
    %v412 = vunpack.c.h.b16 %v248
    %v413 = vunpack.c.l.b16 %v249
    %v414 = vunpack.c.h.b16 %v249
    %v415 = vunpack.c.l.b16 %v250
    %v416 = vunpack.c.h.b16 %v250
    %v417 = vunpack.c.l.b16 %v251
    %v418 = vunpack.c.h.b16 %v251
    %v419 = vunpack.c.l.b16 %v252
    %v420 = vunpack.c.h.b16 %v252
    %v421 = vunpack.c.l.b16 %v253
    %v422 = vunpack.c.h.b16 %v253
    %v423 = vunpack.c.l.b16 %v254
    %v424 = vunpack.c.h.b16 %v254
    %v425 = vunpack.c.l.b16 %v255
    %v426 = vunpack.c.h.b16 %v255
    %v427 = vunpack.c.l.b16 %v256
    %v428 = vunpack.c.h.b16 %v256
    %v429 = vunpack.c.l.b16 %v257
    %v430 = vunpack.c.h.b16 %v257
    %v431 = vunpack.c.l.b16 %v258
    %v432 = vunpack.c.h.b16 %v258
    %v433 = vunpack.c.l.b16 %v259
    %v434 = vunpack.c.h.b16 %v259
    %v435 = vunpack.c.l.b16 %v260
    %v436 = vunpack.c.h.b16 %v260
    %v437 = vunpack.c.l.b16 %v261
    %v438 = vunpack.c.h.b16 %v261
    %v439 = vunpack.c.l.b16 %v262
    %v440 = vunpack.c.h.b16 %v262
    %v441 = vunpack.c.l.b16 %v263
    %v442 = vunpack.c.h.b16 %v263
    %v443 = vunpack.c.l.b16 %v264
    %v444 = vunpack.c.h.b16 %v264
    %v445 = vunpack.c.l.b16 %v265
    %v446 = vunpack.c.h.b16 %v265
    %v447 = vunpack.c.l.b16 %v266
    %v448 = vunpack.c.h.b16 %v266
    %v449 = vunpack.c.l.b16 %v267
    %v450 = vunpack.c.h.b16 %v267
    %v451 = vunpack.c.l.b16 %v268
    %v452 = vunpack.c.h.b16 %v268
    %v453 = vunpack.c.l.b16 %v269
    %v454 = vunpack.c.h.b16 %v269
    %v455 = vunpack.c.l.b16 %v270
    %v456 = vunpack.c.h.b16 %v270
    %v457 = vunpack.c.l.b16 %v271
    %v458 = vunpack.c.h.b16 %v271
    %v459 = vunpack.c.l.b16 %v272
    %v460 = vunpack.c.h.b16 %v272
    %v461 = vunpack.c.l.b16 %v273
    %v462 = vunpack.c.h.b16 %v273
    %v463 = vunpack.c.l.b16 %v274
    %v464 = vunpack.c.h.b16 %v274
    %v465 = vunpack.c.l.b16 %v275
    %v466 = vunpack.c.h.b16 %v275
    %v467 = vunpack.c.l.b16 %v276
    %v468 = vunpack.c.h.b16 %v276
    %v469 = vunpack.c.l.b16 %v277
    %v470 = vunpack.c.h.b16 %v277
    %v471 = vunpack.c.l.b16 %v278
    %v472 = vunpack.c.h.b16 %v278
    %v473 = vunpack.c.l.b16 %v279
    %v474 = vunpack.c.h.b16 %v279
    %v475 = vunpack.c.l.b16 %v280
    %v476 = vunpack.c.h.b16 %v280
    %v477 = vunpack.c.l.b16 %v281
    %v478 = vunpack.c.h.b16 %v281
    %v479 = vunpack.c.l.b16 %v282
    %v480 = vunpack.c.h.b16 %v282
    %v481 = vunpack.c.l.b16 %v283
    %v482 = vunpack.c.h.b16 %v283
    %v483 = vunpack.c.l.b16 %v284
    %v484 = vunpack.c.h.b16 %v284
    %v485 = vunpack.c.l.b16 %v285
    %v486 = vunpack.c.h.b16 %v285
    %v487 = vpack.c.b16 %v363, %v359
    %v488 = vpack.c.b16 %v364, %v360
    %v489 = vpack.c.b16 %v365, %v361
    %v490 = vpack.c.b16 %v366, %v362
    %v491 = vpack.c.b16 %v371, %v367
    %v492 = vpack.c.b16 %v372, %v368
    %v493 = vpack.c.b16 %v373, %v369
    %v494 = vpack.c.b16 %v374, %v370
    %v495 = vpack.c.b16 %v379, %v375
    %v496 = vpack.c.b16 %v380, %v376
    %v497 = vpack.c.b16 %v381, %v377
    %v498 = vpack.c.b16 %v382, %v378
    %v499 = vpack.c.b16 %v387, %v383
    %v500 = vpack.c.b16 %v388, %v384
    %v501 = vpack.c.b16 %v389, %v385
    %v502 = vpack.c.b16 %v390, %v386
    %v503 = vpack.c.b16 %v395, %v391
    %v504 = vpack.c.b16 %v396, %v392
    %v505 = vpack.c.b16 %v397, %v393
    %v506 = vpack.c.b16 %v398, %v394
    %v507 = vpack.c.b16 %v403, %v399
    %v508 = vpack.c.b16 %v404, %v400
    %v509 = vpack.c.b16 %v405, %v401
    %v510 = vpack.c.b16 %v406, %v402
    %v511 = vpack.c.b16 %v411, %v407
    %v512 = vpack.c.b16 %v412, %v408
    %v513 = vpack.c.b16 %v413, %v409
    %v514 = vpack.c.b16 %v414, %v410
    %v515 = vpack.c.b16 %v419, %v415
    %v516 = vpack.c.b16 %v420, %v416
    %v517 = vpack.c.b16 %v421, %v417
    %v518 = vpack.c.b16 %v422, %v418
    %v519 = vpack.c.b16 %v427, %v423
    %v520 = vpack.c.b16 %v428, %v424
    %v521 = vpack.c.b16 %v429, %v425
    %v522 = vpack.c.b16 %v430, %v426
    %v523 = vpack.c.b16 %v435, %v431
    %v524 = vpack.c.b16 %v436, %v432
    %v525 = vpack.c.b16 %v437, %v433
    %v526 = vpack.c.b16 %v438, %v434
    %v527 = vpack.c.b16 %v443, %v439
    %v528 = vpack.c.b16 %v444, %v440
    %v529 = vpack.c.b16 %v445, %v441
    %v530 = vpack.c.b16 %v446, %v442
    %v531 = vpack.c.b16 %v451, %v447
    %v532 = vpack.c.b16 %v452, %v448
    %v533 = vpack.c.b16 %v453, %v449
    %v534 = vpack.c.b16 %v454, %v450
    %v535 = vpack.c.b16 %v459, %v455
    %v536 = vpack.c.b16 %v460, %v456
    %v537 = vpack.c.b16 %v461, %v457
    %v538 = vpack.c.b16 %v462, %v458
    %v539 = vpack.c.b16 %v467, %v463
    %v540 = vpack.c.b16 %v468, %v464
    %v541 = vpack.c.b16 %v469, %v465
    %v542 = vpack.c.b16 %v470, %v466
    %v543 = vpack.c.b16 %v475, %v471
    %v544 = vpack.c.b16 %v476, %v472
    %v545 = vpack.c.b16 %v477, %v473
    %v546 = vpack.c.b16 %v478, %v474
    %v547 = vpack.c.b16 %v483, %v479
    %v548 = vpack.c.b16 %v484, %v480
    %v549 = vpack.c.b16 %v485, %v481
    %v550 = vpack.c.b16 %v486, %v482
    %615 = vmatpush.bf16.msra.mxu0 %v515
    %616 = vmatpush.bf16.msra.mxu0 %v511
    %617 = vmatpush.bf16.msra.mxu0 %v507
    %618 = vmatpush.bf16.msra.mxu0 %v503
    %619 = vmatpush.bf16.msra.mxu0 %v499
    %620 = vmatpush.bf16.msra.mxu0 %v495
    %621 = vmatpush.bf16.msra.mxu0 %v491
    %622 = vmatpush.bf16.msra.mxu0 %v487
    %623 = vmatmul.bf16.gmra.mxu0 %v215
    %v624 = vpop.f32.mrf.mxu0
    %v625 = vadd.f32 %v287, %v624
    %v626 = vpop.f32.mrf.mxu0
    %627 = vdwg.mxu0
    %628 = vmatpush.bf16.msra.mxu0 %v547
    %629 = vmatpush.bf16.msra.mxu0 %v543
    %630 = vmatpush.bf16.msra.mxu0 %v539
    %631 = vmatpush.bf16.msra.mxu0 %v535
    %632 = vmatpush.bf16.msra.mxu0 %v531
    %633 = vmatpush.bf16.msra.mxu0 %v527
    %634 = vmatpush.bf16.msra.mxu0 %v523
    %635 = vmatpush.bf16.msra.mxu0 %v519
    %636 = vmatmul.bf16.gmra.mxu0 %v216
    %v637 = vpop.f32.mrf.mxu0
    %v638 = vadd.f32 %v625, %v637
    %v639 = vpop.f32.mrf.mxu0
    %640 = vdwg.mxu0
    %641 = vmatpush.bf16.msra.mxu0 %v516
    %642 = vmatpush.bf16.msra.mxu0 %v512
    %643 = vmatpush.bf16.msra.mxu0 %v508
    %644 = vmatpush.bf16.msra.mxu0 %v504
    %645 = vmatpush.bf16.msra.mxu0 %v500
    %646 = vmatpush.bf16.msra.mxu0 %v496
    %647 = vmatpush.bf16.msra.mxu0 %v492
    %648 = vmatpush.bf16.msra.mxu0 %v488
    %649 = vmatmul.bf16.gmra.mxu0 %v215
    %v650 = vpop.f32.mrf.mxu0
    %v651 = vadd.f32 %v288, %v650
    %v652 = vpop.f32.mrf.mxu0
    %653 = vdwg.mxu0
    %654 = vmatpush.bf16.msra.mxu0 %v548
    %655 = vmatpush.bf16.msra.mxu0 %v544
    %656 = vmatpush.bf16.msra.mxu0 %v540
    %657 = vmatpush.bf16.msra.mxu0 %v536
    %658 = vmatpush.bf16.msra.mxu0 %v532
    %659 = vmatpush.bf16.msra.mxu0 %v528
    %660 = vmatpush.bf16.msra.mxu0 %v524
    %661 = vmatpush.bf16.msra.mxu0 %v520
    %662 = vmatmul.bf16.gmra.mxu0 %v216
    %v663 = vpop.f32.mrf.mxu0
    %v664 = vadd.f32 %v651, %v663
    %v665 = vpop.f32.mrf.mxu0
    %666 = vdwg.mxu0
    %667 = vmatpush.bf16.msra.mxu0 %v517
    %668 = vmatpush.bf16.msra.mxu0 %v513
    %669 = vmatpush.bf16.msra.mxu0 %v509
    %670 = vmatpush.bf16.msra.mxu0 %v505
    %671 = vmatpush.bf16.msra.mxu0 %v501
    %672 = vmatpush.bf16.msra.mxu0 %v497
    %673 = vmatpush.bf16.msra.mxu0 %v493
    %674 = vmatpush.bf16.msra.mxu0 %v489
    %675 = vmatmul.bf16.gmra.mxu0 %v215
    %v676 = vpop.f32.mrf.mxu0
    %v677 = vadd.f32 %v289, %v676
    %v678 = vpop.f32.mrf.mxu0
    %679 = vdwg.mxu0
    %680 = vmatpush.bf16.msra.mxu0 %v549
    %681 = vmatpush.bf16.msra.mxu0 %v545
    %682 = vmatpush.bf16.msra.mxu0 %v541
    %683 = vmatpush.bf16.msra.mxu0 %v537
    %684 = vmatpush.bf16.msra.mxu0 %v533
    %685 = vmatpush.bf16.msra.mxu0 %v529
    %686 = vmatpush.bf16.msra.mxu0 %v525
    %687 = vmatpush.bf16.msra.mxu0 %v521
    %688 = vmatmul.bf16.gmra.mxu0 %v216
    %v689 = vpop.f32.mrf.mxu0
    %v690 = vadd.f32 %v677, %v689
    %v691 = vpop.f32.mrf.mxu0
    %692 = vdwg.mxu0
    %693 = vmatpush.bf16.msra.mxu0 %v518
    %694 = vmatpush.bf16.msra.mxu0 %v514
    %695 = vmatpush.bf16.msra.mxu0 %v510
    %696 = vmatpush.bf16.msra.mxu0 %v506
    %697 = vmatpush.bf16.msra.mxu0 %v502
    %698 = vmatpush.bf16.msra.mxu0 %v498
    %699 = vmatpush.bf16.msra.mxu0 %v494
    %700 = vmatpush.bf16.msra.mxu0 %v490
    %701 = vmatmul.bf16.gmra.mxu0 %v215
    %v702 = vpop.f32.mrf.mxu0
    %v703 = vadd.f32 %v290, %v702
    %v704 = vpop.f32.mrf.mxu0
    %705 = vdwg.mxu0
    %706 = vmatpush.bf16.msra.mxu0 %v550
    %707 = vmatpush.bf16.msra.mxu0 %v546
    %708 = vmatpush.bf16.msra.mxu0 %v542
    %709 = vmatpush.bf16.msra.mxu0 %v538
    %710 = vmatpush.bf16.msra.mxu0 %v534
    %711 = vmatpush.bf16.msra.mxu0 %v530
    %712 = vmatpush.bf16.msra.mxu0 %v526
    %713 = vmatpush.bf16.msra.mxu0 %v522
    %714 = vmatmul.bf16.gmra.mxu0 %v216
    %v715 = vpop.f32.mrf.mxu0
    %v716 = vadd.f32 %v703, %v715
    %v717 = vpop.f32.mrf.mxu0
    %718 = vdwg.mxu0
    %v719 = vadd.f32 %v638, %v664
    %v720 = vadd.f32 %v719, %v690
    %v721 = vadd.f32 %v720, %v716
    %722 = vadd.xlane.f32.xlu0 %v721
    %v723 = vpop.xlane.xlu0 %722
    %v724 = vrcp.pop 512.0
    %v725 = vmul.f32 512.0, %v724
    %v726 = vsub.f32 1.0, %v725
    %v727 = vmul.f32 %v724, %v726
    %v728 = vadd.f32 %v724, %v727
    %vm729 = vweird.f32 %v724
    %v730 = vsel %vm729, %v724, %v728
    %v731 = vmul.f32 %v723, %v730
    %v732 = vmul.f32 %v638, %v638
    %v733 = vmul.f32 %v664, %v664
    %v734 = vmul.f32 %v690, %v690
    %v735 = vmul.f32 %v716, %v716
    %v736 = vadd.f32 %v732, %v733
    %v737 = vadd.f32 %v736, %v734
    %v738 = vadd.f32 %v737, %v735
    %739 = vadd.xlane.f32.xlu0 %v738
    %v740 = vpop.xlane.xlu0 %739
    %v741 = vmul.f32 %v740, %v730
    %v742 = vmul.f32 %v731, %v731
    %v743 = vsub.f32 %v741, %v742
    %v744 = vmax.f32 %v743, 0.0
    %v745 = vsub.f32 %v638, %v731
    %v746 = vsub.f32 %v664, %v731
    %v747 = vsub.f32 %v690, %v731
    %v748 = vsub.f32 %v716, %v731
    %v749 = vadd.f32 %v744, 1e-05
    %v750 = vrsqrt.pop %v749
    %v751 = vmul.f32 %v750, %v749
    %v752 = vmul.f32 %v751, %v750
    %v753 = vmul.f32 0.5, %v752
    %v754 = vsub.f32 1.5, %v753
    %v755 = vmul.f32 %v750, %v754
    %vm756 = vweird.f32 %v749
    %vm757 = vweird.f32 %v750
    %vm758 = vmor %vm756, %vm757
    %v759 = vsel %vm758, %v750, %v755
    %v760 = vmul.f32 %v745, %v759
    %v761 = vmul.f32 %v746, %v759
    %v762 = vmul.f32 %v747, %v759
    %v763 = vmul.f32 %v748, %v759
    %v765 = vperm.slane %v219, 0
    %v766 = vperm.slane %v219, 1
    %v767 = vperm.slane %v219, 2
    %v768 = vperm.slane %v219, 3
    %v773 = vmul.f32 %v760, %v765
    %v774 = vmul.f32 %v761, %v766
    %v775 = vmul.f32 %v762, %v767
    %v776 = vmul.f32 %v763, %v768
    %v778 = vperm.slane %v221, 0
    %v779 = vperm.slane %v221, 1
    %v780 = vperm.slane %v221, 2
    %v781 = vperm.slane %v221, 3
    %v786 = vadd.f32 %v773, %v778
    %v787 = vadd.f32 %v774, %v779
    %v788 = vadd.f32 %v775, %v780
    %v789 = vadd.f32 %v776, %v781
    %v790 = vmul.f32 %v786, 0.2
    %v791 = vmul.f32 %v787, 0.2
    %v792 = vmul.f32 %v788, 0.2
    %v793 = vmul.f32 %v789, 0.2
    %v794 = vmax.f32 %v786, %v790
    %v795 = vmax.f32 %v787, %v791
    %v796 = vmax.f32 %v788, %v792
    %v797 = vmax.f32 %v789, %v793
    %v798 = vpack.c.bf16 %v794, %v794
    %v799 = vpack.c.bf16 %v795, %v795
    %v800 = vpack.c.bf16 %v796, %v796
    %v801 = vpack.c.bf16 %v797, %v797
    %v802 = vld [vmem:[%s6] ss:$4 sm:$0x3]
    %s803 = scalar_lea.vmem %s6, 1
    %v804 = vld [vmem:[%s803] ss:$4 sm:$0x3]
    %s805 = scalar_lea.vmem %s6, 2
    %v806 = vld [vmem:[%s805] ss:$4 sm:$0x3]
    %v807 = vld [vmem:[%s5] sm:$0xff]
    %v808 = vld [vmem:[%s5 + $0x8] sm:$0xff]
    %v809 = vld [vmem:[%s5 + $0x10] sm:$0xff]
    %v810 = vld [vmem:[%s5 + $0x18] sm:$0xff]
    %v811 = vld [vmem:[%s5 + $0x20] sm:$0xff]
    %v812 = vld [vmem:[%s5 + $0x28] sm:$0xff]
    %v813 = vld [vmem:[%s5 + $0x30] sm:$0xff]
    %v814 = vld [vmem:[%s5 + $0x38] sm:$0xff]
    %v815 = vld [vmem:[%s5 + $0x40] sm:$0xff]
    %v816 = vld [vmem:[%s5 + $0x48] sm:$0xff]
    %v817 = vld [vmem:[%s5 + $0x50] sm:$0xff]
    %v818 = vld [vmem:[%s5 + $0x58] sm:$0xff]
    %v819 = vld [vmem:[%s5 + $0x60] sm:$0xff]
    %v820 = vld [vmem:[%s5 + $0x68] sm:$0xff]
    %v821 = vld [vmem:[%s5 + $0x70] sm:$0xff]
    %v822 = vld [vmem:[%s5 + $0x78] sm:$0xff]
    %v823 = vld [vmem:[%s5 + $0x80] sm:$0xff]
    %v824 = vld [vmem:[%s5 + $0x88] sm:$0xff]
    %v825 = vld [vmem:[%s5 + $0x90] sm:$0xff]
    %v826 = vld [vmem:[%s5 + $0x98] sm:$0xff]
    %v827 = vld [vmem:[%s5 + $0xa0] sm:$0xff]
    %v828 = vld [vmem:[%s5 + $0xa8] sm:$0xff]
    %v829 = vld [vmem:[%s5 + $0xb0] sm:$0xff]
    %v830 = vld [vmem:[%s5 + $0xb8] sm:$0xff]
    %v831 = vld [vmem:[%s5 + $0xc0] sm:$0xff]
    %v832 = vld [vmem:[%s5 + $0xc8] sm:$0xff]
    %v833 = vld [vmem:[%s5 + $0xd0] sm:$0xff]
    %v834 = vld [vmem:[%s5 + $0xd8] sm:$0xff]
    %v835 = vld [vmem:[%s5 + $0xe0] sm:$0xff]
    %v836 = vld [vmem:[%s5 + $0xe8] sm:$0xff]
    %v837 = vld [vmem:[%s5 + $0xf0] sm:$0xff]
    %v838 = vld [vmem:[%s5 + $0xf8] sm:$0xff]
    %v839 = vld [vmem:[%s5 + $0x100] sm:$0xff]
    %v840 = vld [vmem:[%s5 + $0x108] sm:$0xff]
    %v841 = vld [vmem:[%s5 + $0x110] sm:$0xff]
    %v842 = vld [vmem:[%s5 + $0x118] sm:$0xff]
    %v843 = vld [vmem:[%s5 + $0x120] sm:$0xff]
    %v844 = vld [vmem:[%s5 + $0x128] sm:$0xff]
    %v845 = vld [vmem:[%s5 + $0x130] sm:$0xff]
    %v846 = vld [vmem:[%s5 + $0x138] sm:$0xff]
    %v847 = vld [vmem:[%s5 + $0x140] sm:$0xff]
    %v848 = vld [vmem:[%s5 + $0x148] sm:$0xff]
    %v849 = vld [vmem:[%s5 + $0x150] sm:$0xff]
    %v850 = vld [vmem:[%s5 + $0x158] sm:$0xff]
    %v851 = vld [vmem:[%s5 + $0x160] sm:$0xff]
    %v852 = vld [vmem:[%s5 + $0x168] sm:$0xff]
    %v853 = vld [vmem:[%s5 + $0x170] sm:$0xff]
    %v854 = vld [vmem:[%s5 + $0x178] sm:$0xff]
    %v855 = vld [vmem:[%s5 + $0x180] sm:$0xff]
    %v856 = vld [vmem:[%s5 + $0x188] sm:$0xff]
    %v857 = vld [vmem:[%s5 + $0x190] sm:$0xff]
    %v858 = vld [vmem:[%s5 + $0x198] sm:$0xff]
    %v859 = vld [vmem:[%s5 + $0x1a0] sm:$0xff]
    %v860 = vld [vmem:[%s5 + $0x1a8] sm:$0xff]
    %v861 = vld [vmem:[%s5 + $0x1b0] sm:$0xff]
    %v862 = vld [vmem:[%s5 + $0x1b8] sm:$0xff]
    %v863 = vld [vmem:[%s5 + $0x1c0] sm:$0xff]
    %v864 = vld [vmem:[%s5 + $0x1c8] sm:$0xff]
    %v865 = vld [vmem:[%s5 + $0x1d0] sm:$0xff]
    %v866 = vld [vmem:[%s5 + $0x1d8] sm:$0xff]
    %v867 = vld [vmem:[%s5 + $0x1e0] sm:$0xff]
    %v868 = vld [vmem:[%s5 + $0x1e8] sm:$0xff]
    %v869 = vld [vmem:[%s5 + $0x1f0] sm:$0xff]
    %v870 = vld [vmem:[%s5 + $0x1f8] sm:$0xff]
    %v872 = vperm.slane %v802, 0
    %v873 = vperm.slane %v802, 1
    %v940 = vunpack.c.l.b16 %v807
    %v941 = vunpack.c.h.b16 %v807
    %v942 = vunpack.c.l.b16 %v808
    %v943 = vunpack.c.h.b16 %v808
    %v944 = vunpack.c.l.b16 %v809
    %v945 = vunpack.c.h.b16 %v809
    %v946 = vunpack.c.l.b16 %v810
    %v947 = vunpack.c.h.b16 %v810
    %v948 = vunpack.c.l.b16 %v811
    %v949 = vunpack.c.h.b16 %v811
    %v950 = vunpack.c.l.b16 %v812
    %v951 = vunpack.c.h.b16 %v812
    %v952 = vunpack.c.l.b16 %v813
    %v953 = vunpack.c.h.b16 %v813
    %v954 = vunpack.c.l.b16 %v814
    %v955 = vunpack.c.h.b16 %v814
    %v956 = vunpack.c.l.b16 %v815
    %v957 = vunpack.c.h.b16 %v815
    %v958 = vunpack.c.l.b16 %v816
    %v959 = vunpack.c.h.b16 %v816
    %v960 = vunpack.c.l.b16 %v817
    %v961 = vunpack.c.h.b16 %v817
    %v962 = vunpack.c.l.b16 %v818
    %v963 = vunpack.c.h.b16 %v818
    %v964 = vunpack.c.l.b16 %v819
    %v965 = vunpack.c.h.b16 %v819
    %v966 = vunpack.c.l.b16 %v820
    %v967 = vunpack.c.h.b16 %v820
    %v968 = vunpack.c.l.b16 %v821
    %v969 = vunpack.c.h.b16 %v821
    %v970 = vunpack.c.l.b16 %v822
    %v971 = vunpack.c.h.b16 %v822
    %v972 = vunpack.c.l.b16 %v823
    %v973 = vunpack.c.h.b16 %v823
    %v974 = vunpack.c.l.b16 %v824
    %v975 = vunpack.c.h.b16 %v824
    %v976 = vunpack.c.l.b16 %v825
    %v977 = vunpack.c.h.b16 %v825
    %v978 = vunpack.c.l.b16 %v826
    %v979 = vunpack.c.h.b16 %v826
    %v980 = vunpack.c.l.b16 %v827
    %v981 = vunpack.c.h.b16 %v827
    %v982 = vunpack.c.l.b16 %v828
    %v983 = vunpack.c.h.b16 %v828
    %v984 = vunpack.c.l.b16 %v829
    %v985 = vunpack.c.h.b16 %v829
    %v986 = vunpack.c.l.b16 %v830
    %v987 = vunpack.c.h.b16 %v830
    %v988 = vunpack.c.l.b16 %v831
    %v989 = vunpack.c.h.b16 %v831
    %v990 = vunpack.c.l.b16 %v832
    %v991 = vunpack.c.h.b16 %v832
    %v992 = vunpack.c.l.b16 %v833
    %v993 = vunpack.c.h.b16 %v833
    %v994 = vunpack.c.l.b16 %v834
    %v995 = vunpack.c.h.b16 %v834
    %v996 = vunpack.c.l.b16 %v835
    %v997 = vunpack.c.h.b16 %v835
    %v998 = vunpack.c.l.b16 %v836
    %v999 = vunpack.c.h.b16 %v836
    %v1000 = vunpack.c.l.b16 %v837
    %v1001 = vunpack.c.h.b16 %v837
    %v1002 = vunpack.c.l.b16 %v838
    %v1003 = vunpack.c.h.b16 %v838
    %v1004 = vunpack.c.l.b16 %v839
    %v1005 = vunpack.c.h.b16 %v839
    %v1006 = vunpack.c.l.b16 %v840
    %v1007 = vunpack.c.h.b16 %v840
    %v1008 = vunpack.c.l.b16 %v841
    %v1009 = vunpack.c.h.b16 %v841
    %v1010 = vunpack.c.l.b16 %v842
    %v1011 = vunpack.c.h.b16 %v842
    %v1012 = vunpack.c.l.b16 %v843
    %v1013 = vunpack.c.h.b16 %v843
    %v1014 = vunpack.c.l.b16 %v844
    %v1015 = vunpack.c.h.b16 %v844
    %v1016 = vunpack.c.l.b16 %v845
    %v1017 = vunpack.c.h.b16 %v845
    %v1018 = vunpack.c.l.b16 %v846
    %v1019 = vunpack.c.h.b16 %v846
    %v1020 = vunpack.c.l.b16 %v847
    %v1021 = vunpack.c.h.b16 %v847
    %v1022 = vunpack.c.l.b16 %v848
    %v1023 = vunpack.c.h.b16 %v848
    %v1024 = vunpack.c.l.b16 %v849
    %v1025 = vunpack.c.h.b16 %v849
    %v1026 = vunpack.c.l.b16 %v850
    %v1027 = vunpack.c.h.b16 %v850
    %v1028 = vunpack.c.l.b16 %v851
    %v1029 = vunpack.c.h.b16 %v851
    %v1030 = vunpack.c.l.b16 %v852
    %v1031 = vunpack.c.h.b16 %v852
    %v1032 = vunpack.c.l.b16 %v853
    %v1033 = vunpack.c.h.b16 %v853
    %v1034 = vunpack.c.l.b16 %v854
    %v1035 = vunpack.c.h.b16 %v854
    %v1036 = vunpack.c.l.b16 %v855
    %v1037 = vunpack.c.h.b16 %v855
    %v1038 = vunpack.c.l.b16 %v856
    %v1039 = vunpack.c.h.b16 %v856
    %v1040 = vunpack.c.l.b16 %v857
    %v1041 = vunpack.c.h.b16 %v857
    %v1042 = vunpack.c.l.b16 %v858
    %v1043 = vunpack.c.h.b16 %v858
    %v1044 = vunpack.c.l.b16 %v859
    %v1045 = vunpack.c.h.b16 %v859
    %v1046 = vunpack.c.l.b16 %v860
    %v1047 = vunpack.c.h.b16 %v860
    %v1048 = vunpack.c.l.b16 %v861
    %v1049 = vunpack.c.h.b16 %v861
    %v1050 = vunpack.c.l.b16 %v862
    %v1051 = vunpack.c.h.b16 %v862
    %v1052 = vunpack.c.l.b16 %v863
    %v1053 = vunpack.c.h.b16 %v863
    %v1054 = vunpack.c.l.b16 %v864
    %v1055 = vunpack.c.h.b16 %v864
    %v1056 = vunpack.c.l.b16 %v865
    %v1057 = vunpack.c.h.b16 %v865
    %v1058 = vunpack.c.l.b16 %v866
    %v1059 = vunpack.c.h.b16 %v866
    %v1060 = vunpack.c.l.b16 %v867
    %v1061 = vunpack.c.h.b16 %v867
    %v1062 = vunpack.c.l.b16 %v868
    %v1063 = vunpack.c.h.b16 %v868
    %v1064 = vunpack.c.l.b16 %v869
    %v1065 = vunpack.c.h.b16 %v869
    %v1066 = vunpack.c.l.b16 %v870
    %v1067 = vunpack.c.h.b16 %v870
    %v1068 = vpack.c.b16 %v942, %v940
    %v1069 = vpack.c.b16 %v943, %v941
    %v1070 = vpack.c.b16 %v946, %v944
    %v1071 = vpack.c.b16 %v947, %v945
    %v1072 = vpack.c.b16 %v950, %v948
    %v1073 = vpack.c.b16 %v951, %v949
    %v1074 = vpack.c.b16 %v954, %v952
    %v1075 = vpack.c.b16 %v955, %v953
    %v1076 = vpack.c.b16 %v958, %v956
    %v1077 = vpack.c.b16 %v959, %v957
    %v1078 = vpack.c.b16 %v962, %v960
    %v1079 = vpack.c.b16 %v963, %v961
    %v1080 = vpack.c.b16 %v966, %v964
    %v1081 = vpack.c.b16 %v967, %v965
    %v1082 = vpack.c.b16 %v970, %v968
    %v1083 = vpack.c.b16 %v971, %v969
    %v1084 = vpack.c.b16 %v974, %v972
    %v1085 = vpack.c.b16 %v975, %v973
    %v1086 = vpack.c.b16 %v978, %v976
    %v1087 = vpack.c.b16 %v979, %v977
    %v1088 = vpack.c.b16 %v982, %v980
    %v1089 = vpack.c.b16 %v983, %v981
    %v1090 = vpack.c.b16 %v986, %v984
    %v1091 = vpack.c.b16 %v987, %v985
    %v1092 = vpack.c.b16 %v990, %v988
    %v1093 = vpack.c.b16 %v991, %v989
    %v1094 = vpack.c.b16 %v994, %v992
    %v1095 = vpack.c.b16 %v995, %v993
    %v1096 = vpack.c.b16 %v998, %v996
    %v1097 = vpack.c.b16 %v999, %v997
    %v1098 = vpack.c.b16 %v1002, %v1000
    %v1099 = vpack.c.b16 %v1003, %v1001
    %v1100 = vpack.c.b16 %v1006, %v1004
    %v1101 = vpack.c.b16 %v1007, %v1005
    %v1102 = vpack.c.b16 %v1010, %v1008
    %v1103 = vpack.c.b16 %v1011, %v1009
    %v1104 = vpack.c.b16 %v1014, %v1012
    %v1105 = vpack.c.b16 %v1015, %v1013
    %v1106 = vpack.c.b16 %v1018, %v1016
    %v1107 = vpack.c.b16 %v1019, %v1017
    %v1108 = vpack.c.b16 %v1022, %v1020
    %v1109 = vpack.c.b16 %v1023, %v1021
    %v1110 = vpack.c.b16 %v1026, %v1024
    %v1111 = vpack.c.b16 %v1027, %v1025
    %v1112 = vpack.c.b16 %v1030, %v1028
    %v1113 = vpack.c.b16 %v1031, %v1029
    %v1114 = vpack.c.b16 %v1034, %v1032
    %v1115 = vpack.c.b16 %v1035, %v1033
    %v1116 = vpack.c.b16 %v1038, %v1036
    %v1117 = vpack.c.b16 %v1039, %v1037
    %v1118 = vpack.c.b16 %v1042, %v1040
    %v1119 = vpack.c.b16 %v1043, %v1041
    %v1120 = vpack.c.b16 %v1046, %v1044
    %v1121 = vpack.c.b16 %v1047, %v1045
    %v1122 = vpack.c.b16 %v1050, %v1048
    %v1123 = vpack.c.b16 %v1051, %v1049
    %v1124 = vpack.c.b16 %v1054, %v1052
    %v1125 = vpack.c.b16 %v1055, %v1053
    %v1126 = vpack.c.b16 %v1058, %v1056
    %v1127 = vpack.c.b16 %v1059, %v1057
    %v1128 = vpack.c.b16 %v1062, %v1060
    %v1129 = vpack.c.b16 %v1063, %v1061
    %v1130 = vpack.c.b16 %v1066, %v1064
    %v1131 = vpack.c.b16 %v1067, %v1065
    %1196 = vmatpush.bf16.msra.mxu0 %v1082
    %1197 = vmatpush.bf16.msra.mxu0 %v1080
    %1198 = vmatpush.bf16.msra.mxu0 %v1078
    %1199 = vmatpush.bf16.msra.mxu0 %v1076
    %1200 = vmatpush.bf16.msra.mxu0 %v1074
    %1201 = vmatpush.bf16.msra.mxu0 %v1072
    %1202 = vmatpush.bf16.msra.mxu0 %v1070
    %1203 = vmatpush.bf16.msra.mxu0 %v1068
    %1204 = vmatmul.bf16.gmra.mxu0 %v798
    %v1205 = vpop.f32.mrf.mxu0
    %v1206 = vadd.f32 %v872, %v1205
    %v1207 = vpop.f32.mrf.mxu0
    %1208 = vdwg.mxu0
    %1209 = vmatpush.bf16.msra.mxu0 %v1098
    %1210 = vmatpush.bf16.msra.mxu0 %v1096
    %1211 = vmatpush.bf16.msra.mxu0 %v1094
    %1212 = vmatpush.bf16.msra.mxu0 %v1092
    %1213 = vmatpush.bf16.msra.mxu0 %v1090
    %1214 = vmatpush.bf16.msra.mxu0 %v1088
    %1215 = vmatpush.bf16.msra.mxu0 %v1086
    %1216 = vmatpush.bf16.msra.mxu0 %v1084
    %1217 = vmatmul.bf16.gmra.mxu0 %v799
    %v1218 = vpop.f32.mrf.mxu0
    %v1219 = vadd.f32 %v1206, %v1218
    %v1220 = vpop.f32.mrf.mxu0
    %1221 = vdwg.mxu0
    %1222 = vmatpush.bf16.msra.mxu0 %v1114
    %1223 = vmatpush.bf16.msra.mxu0 %v1112
    %1224 = vmatpush.bf16.msra.mxu0 %v1110
    %1225 = vmatpush.bf16.msra.mxu0 %v1108
    %1226 = vmatpush.bf16.msra.mxu0 %v1106
    %1227 = vmatpush.bf16.msra.mxu0 %v1104
    %1228 = vmatpush.bf16.msra.mxu0 %v1102
    %1229 = vmatpush.bf16.msra.mxu0 %v1100
    %1230 = vmatmul.bf16.gmra.mxu0 %v800
    %v1231 = vpop.f32.mrf.mxu0
    %v1232 = vadd.f32 %v1219, %v1231
    %v1233 = vpop.f32.mrf.mxu0
    %1234 = vdwg.mxu0
    %1235 = vmatpush.bf16.msra.mxu0 %v1130
    %1236 = vmatpush.bf16.msra.mxu0 %v1128
    %1237 = vmatpush.bf16.msra.mxu0 %v1126
    %1238 = vmatpush.bf16.msra.mxu0 %v1124
    %1239 = vmatpush.bf16.msra.mxu0 %v1122
    %1240 = vmatpush.bf16.msra.mxu0 %v1120
    %1241 = vmatpush.bf16.msra.mxu0 %v1118
    %1242 = vmatpush.bf16.msra.mxu0 %v1116
    %1243 = vmatmul.bf16.gmra.mxu0 %v801
    %v1244 = vpop.f32.mrf.mxu0
    %v1245 = vadd.f32 %v1232, %v1244
    %v1246 = vpop.f32.mrf.mxu0
    %1247 = vdwg.mxu0
    %1248 = vmatpush.bf16.msra.mxu0 %v1083
    %1249 = vmatpush.bf16.msra.mxu0 %v1081
    %1250 = vmatpush.bf16.msra.mxu0 %v1079
    %1251 = vmatpush.bf16.msra.mxu0 %v1077
    %1252 = vmatpush.bf16.msra.mxu0 %v1075
    %1253 = vmatpush.bf16.msra.mxu0 %v1073
    %1254 = vmatpush.bf16.msra.mxu0 %v1071
    %1255 = vmatpush.bf16.msra.mxu0 %v1069
    %1256 = vmatmul.bf16.gmra.mxu0 %v798
    %v1257 = vpop.f32.mrf.mxu0
    %v1258 = vadd.f32 %v873, %v1257
    %v1259 = vpop.f32.mrf.mxu0
    %1260 = vdwg.mxu0
    %1261 = vmatpush.bf16.msra.mxu0 %v1099
    %1262 = vmatpush.bf16.msra.mxu0 %v1097
    %1263 = vmatpush.bf16.msra.mxu0 %v1095
    %1264 = vmatpush.bf16.msra.mxu0 %v1093
    %1265 = vmatpush.bf16.msra.mxu0 %v1091
    %1266 = vmatpush.bf16.msra.mxu0 %v1089
    %1267 = vmatpush.bf16.msra.mxu0 %v1087
    %1268 = vmatpush.bf16.msra.mxu0 %v1085
    %1269 = vmatmul.bf16.gmra.mxu0 %v799
    %v1270 = vpop.f32.mrf.mxu0
    %v1271 = vadd.f32 %v1258, %v1270
    %v1272 = vpop.f32.mrf.mxu0
    %1273 = vdwg.mxu0
    %1274 = vmatpush.bf16.msra.mxu0 %v1115
    %1275 = vmatpush.bf16.msra.mxu0 %v1113
    %1276 = vmatpush.bf16.msra.mxu0 %v1111
    %1277 = vmatpush.bf16.msra.mxu0 %v1109
    %1278 = vmatpush.bf16.msra.mxu0 %v1107
    %1279 = vmatpush.bf16.msra.mxu0 %v1105
    %1280 = vmatpush.bf16.msra.mxu0 %v1103
    %1281 = vmatpush.bf16.msra.mxu0 %v1101
    %1282 = vmatmul.bf16.gmra.mxu0 %v800
    %v1283 = vpop.f32.mrf.mxu0
    %v1284 = vadd.f32 %v1271, %v1283
    %v1285 = vpop.f32.mrf.mxu0
    %1286 = vdwg.mxu0
    %1287 = vmatpush.bf16.msra.mxu0 %v1131
    %1288 = vmatpush.bf16.msra.mxu0 %v1129
    %1289 = vmatpush.bf16.msra.mxu0 %v1127
    %1290 = vmatpush.bf16.msra.mxu0 %v1125
    %1291 = vmatpush.bf16.msra.mxu0 %v1123
    %1292 = vmatpush.bf16.msra.mxu0 %v1121
    %1293 = vmatpush.bf16.msra.mxu0 %v1119
    %1294 = vmatpush.bf16.msra.mxu0 %v1117
    %1295 = vmatmul.bf16.gmra.mxu0 %v801
    %v1296 = vpop.f32.mrf.mxu0
    %v1297 = vadd.f32 %v1284, %v1296
    %v1298 = vpop.f32.mrf.mxu0
    %1299 = vdwg.mxu0
    %v1300 = vadd.f32 %v1245, %v1297
    %1301 = vadd.xlane.f32.xlu0 %v1300
    %v1302 = vpop.xlane.xlu0 %1301
    %v1303 = vmul.f32 %v1302, %v171
    %v1304 = vmul.f32 %v1245, %v1245
    %v1305 = vmul.f32 %v1297, %v1297
    %v1306 = vadd.f32 %v1304, %v1305
    %1307 = vadd.xlane.f32.xlu0 %v1306
    %v1308 = vpop.xlane.xlu0 %1307
    %v1309 = vmul.f32 %v1308, %v171
    %v1310 = vmul.f32 %v1303, %v1303
    %v1311 = vsub.f32 %v1309, %v1310
    %v1312 = vmax.f32 %v1311, 0.0
    %v1313 = vsub.f32 %v1245, %v1303
    %v1314 = vsub.f32 %v1297, %v1303
    %v1315 = vadd.f32 %v1312, 1e-05
    %v1316 = vrsqrt.pop %v1315
    %v1317 = vmul.f32 %v1316, %v1315
    %v1318 = vmul.f32 %v1317, %v1316
    %v1319 = vmul.f32 0.5, %v1318
    %v1320 = vsub.f32 1.5, %v1319
    %v1321 = vmul.f32 %v1316, %v1320
    %vm1322 = vweird.f32 %v1315
    %vm1323 = vweird.f32 %v1316
    %vm1324 = vmor %vm1322, %vm1323
    %v1325 = vsel %vm1324, %v1316, %v1321
    %v1326 = vmul.f32 %v1313, %v1325
    %v1327 = vmul.f32 %v1314, %v1325
    %v1329 = vperm.slane %v804, 0
    %v1330 = vperm.slane %v804, 1
    %v1333 = vmul.f32 %v1326, %v1329
    %v1334 = vmul.f32 %v1327, %v1330
    %v1336 = vperm.slane %v806, 0
    %v1337 = vperm.slane %v806, 1
    %v1340 = vadd.f32 %v1333, %v1336
    %v1341 = vadd.f32 %v1334, %v1337
    %v1342 = vmul.f32 %v1340, 0.2
    %v1343 = vmul.f32 %v1341, 0.2
    %v1344 = vmax.f32 %v1340, %v1342
    %v1345 = vmax.f32 %v1341, %v1343
    %v1346 = vpack.c.bf16 %v1344, %v1344
    %v1347 = vpack.c.bf16 %v1345, %v1345
    %v1348 = vld [vmem:[%s8] sm:$0x1]
    %v1349 = vld [vmem:[%s8 + $0x1] sm:$0x1]
    %v1350 = vld [vmem:[%s8 + $0x2] sm:$0x1]
    %v1351 = vld [vmem:[%s7] sm:$0xf]
    %v1352 = vld [vmem:[%s7 + $0x4] sm:$0xf]
    %v1353 = vld [vmem:[%s7 + $0x8] sm:$0xf]
    %v1354 = vld [vmem:[%s7 + $0xc] sm:$0xf]
    %v1355 = vld [vmem:[%s7 + $0x10] sm:$0xf]
    %v1356 = vld [vmem:[%s7 + $0x14] sm:$0xf]
    %v1357 = vld [vmem:[%s7 + $0x18] sm:$0xf]
    %v1358 = vld [vmem:[%s7 + $0x1c] sm:$0xf]
    %v1359 = vld [vmem:[%s7 + $0x20] sm:$0xf]
    %v1360 = vld [vmem:[%s7 + $0x24] sm:$0xf]
    %v1361 = vld [vmem:[%s7 + $0x28] sm:$0xf]
    %v1362 = vld [vmem:[%s7 + $0x2c] sm:$0xf]
    %v1363 = vld [vmem:[%s7 + $0x30] sm:$0xf]
    %v1364 = vld [vmem:[%s7 + $0x34] sm:$0xf]
    %v1365 = vld [vmem:[%s7 + $0x38] sm:$0xf]
    %v1366 = vld [vmem:[%s7 + $0x3c] sm:$0xf]
    %v1367 = vld [vmem:[%s7 + $0x40] sm:$0xf]
    %v1368 = vld [vmem:[%s7 + $0x44] sm:$0xf]
    %v1369 = vld [vmem:[%s7 + $0x48] sm:$0xf]
    %v1370 = vld [vmem:[%s7 + $0x4c] sm:$0xf]
    %v1371 = vld [vmem:[%s7 + $0x50] sm:$0xf]
    %v1372 = vld [vmem:[%s7 + $0x54] sm:$0xf]
    %v1373 = vld [vmem:[%s7 + $0x58] sm:$0xf]
    %v1374 = vld [vmem:[%s7 + $0x5c] sm:$0xf]
    %v1375 = vld [vmem:[%s7 + $0x60] sm:$0xf]
    %v1376 = vld [vmem:[%s7 + $0x64] sm:$0xf]
    %v1377 = vld [vmem:[%s7 + $0x68] sm:$0xf]
    %v1378 = vld [vmem:[%s7 + $0x6c] sm:$0xf]
    %v1379 = vld [vmem:[%s7 + $0x70] sm:$0xf]
    %v1380 = vld [vmem:[%s7 + $0x74] sm:$0xf]
    %v1381 = vld [vmem:[%s7 + $0x78] sm:$0xf]
    %v1382 = vld [vmem:[%s7 + $0x7c] sm:$0xf]
    %v1383 = vperm.slane %v1348, 0
    %v1416 = vunpack.c.l.b16 %v1351
    %v1417 = vunpack.c.l.b16 %v1352
    %v1418 = vunpack.c.l.b16 %v1353
    %v1419 = vunpack.c.l.b16 %v1354
    %v1420 = vunpack.c.l.b16 %v1355
    %v1421 = vunpack.c.l.b16 %v1356
    %v1422 = vunpack.c.l.b16 %v1357
    %v1423 = vunpack.c.l.b16 %v1358
    %v1424 = vunpack.c.l.b16 %v1359
    %v1425 = vunpack.c.l.b16 %v1360
    %v1426 = vunpack.c.l.b16 %v1361
    %v1427 = vunpack.c.l.b16 %v1362
    %v1428 = vunpack.c.l.b16 %v1363
    %v1429 = vunpack.c.l.b16 %v1364
    %v1430 = vunpack.c.l.b16 %v1365
    %v1431 = vunpack.c.l.b16 %v1366
    %v1432 = vunpack.c.l.b16 %v1367
    %v1433 = vunpack.c.l.b16 %v1368
    %v1434 = vunpack.c.l.b16 %v1369
    %v1435 = vunpack.c.l.b16 %v1370
    %v1436 = vunpack.c.l.b16 %v1371
    %v1437 = vunpack.c.l.b16 %v1372
    %v1438 = vunpack.c.l.b16 %v1373
    %v1439 = vunpack.c.l.b16 %v1374
    %v1440 = vunpack.c.l.b16 %v1375
    %v1441 = vunpack.c.l.b16 %v1376
    %v1442 = vunpack.c.l.b16 %v1377
    %v1443 = vunpack.c.l.b16 %v1378
    %v1444 = vunpack.c.l.b16 %v1379
    %v1445 = vunpack.c.l.b16 %v1380
    %v1446 = vunpack.c.l.b16 %v1381
    %v1447 = vunpack.c.l.b16 %v1382
    %v1448 = vpack.c.b16 %v1417, %v1416
    %v1449 = vpack.c.b16 %v1419, %v1418
    %v1450 = vpack.c.b16 %v1421, %v1420
    %v1451 = vpack.c.b16 %v1423, %v1422
    %v1452 = vpack.c.b16 %v1425, %v1424
    %v1453 = vpack.c.b16 %v1427, %v1426
    %v1454 = vpack.c.b16 %v1429, %v1428
    %v1455 = vpack.c.b16 %v1431, %v1430
    %v1456 = vpack.c.b16 %v1433, %v1432
    %v1457 = vpack.c.b16 %v1435, %v1434
    %v1458 = vpack.c.b16 %v1437, %v1436
    %v1459 = vpack.c.b16 %v1439, %v1438
    %v1460 = vpack.c.b16 %v1441, %v1440
    %v1461 = vpack.c.b16 %v1443, %v1442
    %v1462 = vpack.c.b16 %v1445, %v1444
    %v1463 = vpack.c.b16 %v1447, %v1446
    %1480 = vmatpush.bf16.msra.mxu0 %v1455
    %1481 = vmatpush.bf16.msra.mxu0 %v1454
    %1482 = vmatpush.bf16.msra.mxu0 %v1453
    %1483 = vmatpush.bf16.msra.mxu0 %v1452
    %1484 = vmatpush.bf16.msra.mxu0 %v1451
    %1485 = vmatpush.bf16.msra.mxu0 %v1450
    %1486 = vmatpush.bf16.msra.mxu0 %v1449
    %1487 = vmatpush.bf16.msra.mxu0 %v1448
    %1488 = vmatmul.bf16.gmra.mxu0 %v1346
    %v1489 = vpop.f32.mrf.mxu0
    %v1490 = vadd.f32 %v1383, %v1489
    %v1491 = vpop.f32.mrf.mxu0
    %1492 = vdwg.mxu0
    %1493 = vmatpush.bf16.msra.mxu0 %v1463
    %1494 = vmatpush.bf16.msra.mxu0 %v1462
    %1495 = vmatpush.bf16.msra.mxu0 %v1461
    %1496 = vmatpush.bf16.msra.mxu0 %v1460
    %1497 = vmatpush.bf16.msra.mxu0 %v1459
    %1498 = vmatpush.bf16.msra.mxu0 %v1458
    %1499 = vmatpush.bf16.msra.mxu0 %v1457
    %1500 = vmatpush.bf16.msra.mxu0 %v1456
    %1501 = vmatmul.bf16.gmra.mxu0 %v1347
    %v1502 = vpop.f32.mrf.mxu0
    %v1503 = vadd.f32 %v1490, %v1502
    %v1504 = vpop.f32.mrf.mxu0
    %1505 = vdwg.mxu0
    %1506 = vadd.xlane.f32.xlu0 %v1503
    %v1507 = vpop.xlane.xlu0 %1506
    %v1508 = vrcp.pop 128.0
    %v1509 = vmul.f32 128.0, %v1508
    %v1510 = vsub.f32 1.0, %v1509
    %v1511 = vmul.f32 %v1508, %v1510
    %v1512 = vadd.f32 %v1508, %v1511
    %vm1513 = vweird.f32 %v1508
    %v1514 = vsel %vm1513, %v1508, %v1512
    %v1515 = vmul.f32 %v1507, %v1514
    %v1516 = vmul.f32 %v1503, %v1503
    %1517 = vadd.xlane.f32.xlu0 %v1516
    %v1518 = vpop.xlane.xlu0 %1517
    %v1519 = vmul.f32 %v1518, %v1514
    %v1520 = vmul.f32 %v1515, %v1515
    %v1521 = vsub.f32 %v1519, %v1520
    %v1522 = vmax.f32 %v1521, 0.0
    %v1523 = vsub.f32 %v1503, %v1515
    %v1524 = vadd.f32 %v1522, 1e-05
    %v1525 = vrsqrt.pop %v1524
    %v1526 = vmul.f32 %v1525, %v1524
    %v1527 = vmul.f32 %v1526, %v1525
    %v1528 = vmul.f32 0.5, %v1527
    %v1529 = vsub.f32 1.5, %v1528
    %v1530 = vmul.f32 %v1525, %v1529
    %vm1531 = vweird.f32 %v1524
    %vm1532 = vweird.f32 %v1525
    %vm1533 = vmor %vm1531, %vm1532
    %v1534 = vsel %vm1533, %v1525, %v1530
    %v1535 = vmul.f32 %v1523, %v1534
    %v1536 = vperm.slane %v1349, 0
    %v1537 = vmul.f32 %v1535, %v1536
    %v1538 = vperm.slane %v1350, 0
    %v1539 = vadd.f32 %v1537, %v1538
    %v1540 = vmul.f32 %v1539, 0.2
    %v1541 = vmax.f32 %v1539, %v1540
    %v1542 = vpack.c.bf16 %v1541, %v1541
    %v1543 = vld [vmem:[%s9] sm:$0xf]
    %v1544 = vld [vmem:[%s9 + $0x4] sm:$0xf]
    %v1545 = vld [vmem:[%s9 + $0x8] sm:$0xf]
    %v1546 = vld [vmem:[%s9 + $0xc] sm:$0xf]
    %v1547 = vld [vmem:[%s9 + $0x10] sm:$0xf]
    %v1548 = vld [vmem:[%s9 + $0x14] sm:$0xf]
    %v1549 = vld [vmem:[%s9 + $0x18] sm:$0xf]
    %v1550 = vld [vmem:[%s9 + $0x1c] sm:$0xf]
    %v1551 = vld [vmem:[%s9 + $0x20] sm:$0xf]
    %v1552 = vld [vmem:[%s9 + $0x24] sm:$0xf]
    %v1553 = vld [vmem:[%s9 + $0x28] sm:$0xf]
    %v1554 = vld [vmem:[%s9 + $0x2c] sm:$0xf]
    %v1555 = vld [vmem:[%s9 + $0x30] sm:$0xf]
    %v1556 = vld [vmem:[%s9 + $0x34] sm:$0xf]
    %v1557 = vld [vmem:[%s9 + $0x38] sm:$0xf]
    %v1558 = vld [vmem:[%s9 + $0x3c] sm:$0xf]
    %v1559 = vld [vmem:[%s10] sm:$0x1]
    %v1561 = vperm.slane %v1559, 0
    %v1579 = vunpack.c.l.b16 %v1543
    %v1580 = vunpack.c.l.b16 %v1544
    %v1581 = vunpack.c.l.b16 %v1545
    %v1582 = vunpack.c.l.b16 %v1546
    %v1583 = vunpack.c.l.b16 %v1547
    %v1584 = vunpack.c.l.b16 %v1548
    %v1585 = vunpack.c.l.b16 %v1549
    %v1586 = vunpack.c.l.b16 %v1550
    %v1587 = vunpack.c.l.b16 %v1551
    %v1588 = vunpack.c.l.b16 %v1552
    %v1589 = vunpack.c.l.b16 %v1553
    %v1590 = vunpack.c.l.b16 %v1554
    %v1591 = vunpack.c.l.b16 %v1555
    %v1592 = vunpack.c.l.b16 %v1556
    %v1593 = vunpack.c.l.b16 %v1557
    %v1594 = vunpack.c.l.b16 %v1558
    %v1595 = vpack.c.b16 %v1580, %v1579
    %v1596 = vpack.c.b16 %v1582, %v1581
    %v1597 = vpack.c.b16 %v1584, %v1583
    %v1598 = vpack.c.b16 %v1586, %v1585
    %v1599 = vpack.c.b16 %v1588, %v1587
    %v1600 = vpack.c.b16 %v1590, %v1589
    %v1601 = vpack.c.b16 %v1592, %v1591
    %v1602 = vpack.c.b16 %v1594, %v1593
    %1611 = vmatpush.bf16.msra.mxu0 %v1602
    %1612 = vmatpush.bf16.msra.mxu0 %v1601
    %1613 = vmatpush.bf16.msra.mxu0 %v1600
    %1614 = vmatpush.bf16.msra.mxu0 %v1599
    %1615 = vmatpush.bf16.msra.mxu0 %v1598
    %1616 = vmatpush.bf16.msra.mxu0 %v1597
    %1617 = vmatpush.bf16.msra.mxu0 %v1596
    %1618 = vmatpush.bf16.msra.mxu0 %v1595
    %1619 = vmatmul.bf16.gmra.mxu0 %v1542
    %v1620 = vpop.f32.mrf.mxu0
    %v1621 = vadd.f32 %v1561, %v1620
    %v1622 = vpop.f32.mrf.mxu0
    %1623 = vdwg.mxu0
    %1624 = vmax.xlane.f32.xlu0 %v1621
    %v1625 = vpop.xlane.xlu0 %1624
    %v1626 = vsub.f32 %v1621, %v1625
    %v1627 = vmul.f32 %v1626, 1.442695
    %v1628 = vpow.pop %v1627
    %1629 = vadd.xlane.f32.xlu0 %v1628
    %v1630 = vpop.xlane.xlu0 %1629
    %v1631 = vrcp.pop %v1630
    %v1632 = vmul.f32 %v1630, %v1631
    %v1633 = vsub.f32 1.0, %v1632
    %v1634 = vmul.f32 %v1631, %v1633
    %v1635 = vadd.f32 %v1631, %v1634
    %vm1636 = vweird.f32 %v1630
    %vm1637 = vweird.f32 %v1631
    %vm1638 = vmor %vm1636, %vm1637
    %v1639 = vsel %vm1638, %v1631, %v1635
    %v1640 = vand.u32 2147483647, %v1630
    %vm1641 = vcmp.eq.f32.partialorder %v1640, 8.507059e+37
    %v1642 = vand.u32 %v1630, 2147483648
    %v1643 = vor.u32 1.1754944e-38, %v1642
    %v1644 = vsel %vm1641, %v1643, %v1639
    %v1645 = vmul.f32 %v1628, %v1644
    %1646 = vst [vmem:[#allocation2] sm:$0xff] %v1645
    // Predicated region
    $region46: #{refined_ann_forward.1} parent=1 // pred_check
      _
    $region47: #{refined_ann_forward.1} parent=1 // pred_check_branch
      %1648 = sbr.rel (0) target = $region49
    $region48: #{refined_ann_forward.1} parent=1 // pred_region
      %1650 = vsyncadd [#allocation3], 0
      %s1652 = sshll.u32 [#allocation2], 4
      %s1653 = int_to_ptr.vmem [resolvable:$true] %s1652
      %s1654 = sshll.u32 %s11, 4
      %s1655 = int_to_ptr.hbm [resolvable:$true] %s1654
      %1657 = dma.vmem_to_hbm [thread:$0]  %s1653, 128, %s1655, [#allocation3]
    $region49: #{refined_ann_forward.1} parent=1 // pred_fallthru
      _
    // Predicated region
    $region50: #{refined_ann_forward.1} parent=1 // pred_check
      _
    $region51: #{refined_ann_forward.1} parent=1 // pred_check_branch
      %1659 = sbr.rel (0) target = $region53
    $region52: #{refined_ann_forward.1} parent=1 // pred_region
      %1661 = dma.done [#allocation3], 128
    $region53: #{refined_ann_forward.1} parent=1 // pred_fallthru
      _
    %1662 = vsyncpa [#allocation3], 1

</llo_original>
